<compile_context>
chip_gen: v7x
topology: tpu7x:2x2x1
jax: 0.10.0
libtpu: 0.0.40
codegen_flags: <defaults>
</compile_context>

<pallas_src>
import math

import jax
import jax.numpy as jnp
from jax import lax
from jax.experimental import pallas as pl
from jax.experimental.pallas import tpu as pltpu

# ---------------- scaled-down config (mirrors CFG, small shapes) ----------------
BATCH = 8
IMG_C = 16
IMG_HW = 16                  # H = W = 16 -> 256 pixels (lane-dense)
SEQ = 16
VOCAB = 64
IMAGE_EMBEDDING = 256        # stands in for CFG.image_embedding = 2048
TEXT_EMBEDDING = 128         # stands in for CFG.text_embedding  = 768
PROJECTION_DIM = 128         # stands in for CFG.projection_dim  = 256
TEMPERATURE = 1.0            # CFG.temperature
LN_EPS = 1e-5                # nn.LayerNorm default eps


def _mm(a, b):
    return jnp.dot(a, b, preferred_element_type=jnp.float32)


# ---------------------------- fused forward kernel ----------------------------
def _clip_forward_kernel(x_ref, tok_ref, wimg_ref, w1i_ref, w128_ref, vec_ref, loss_ref):
    b = x_ref.shape[0]                       # 8  (batch)
    c = x_ref.shape[1]                       # 16 (image channels)
    p = PROJECTION_DIM                       # 128

    # ---- packed parameter views (static, tile-aligned slices) ----
    w_img = wimg_ref[0:c, :]                 # (16, 256), pre-scaled by 1/(H*W)
    b_img = wimg_ref[c:c + b, :]             # (8, 256)  bias broadcast over batch rows
    w_txt = w128_ref[:, 0:p]                 # (128, 128)
    w1_txt = w128_ref[:, p:2 * p]            # (128, 128)
    w2_cat = w128_ref[:, 2 * p:4 * p]        # (128, 256) = [W2_img | W2_txt]
    b1_st = vec_ref[0:2 * b, :]              # (16, 128)  [bi1 ; bt1]
    b2_st = vec_ref[2 * b:4 * b, :]          # (16, 128)  [bi2 ; bt2]
    gamma_st = vec_ref[4 * b:6 * b, :]       # (16, 128)  [gamma_i ; gamma_t]
    beta_st = vec_ref[6 * b:8 * b, :]        # (16, 128)  [beta_i ; beta_t]
    b_txt = vec_ref[8 * b:9 * b, :]          # (8, 128)
    pool_m = vec_ref[9 * b:10 * b, :]        # (8, 128)   mask/denom pooling matrix

    # ---- image encoder stand-in: sum-pool over pixels (w_img pre-scaled) + Linear
    pooled_img = jnp.sum(x_ref[...], axis=-1)                       # (8, 16) lane reduce
    img_feat = _mm(pooled_img, w_img) + b_img                       # (8, 256)

    # ---- text encoder stand-in: masked mean-pool as ONE MXU matmul + Linear
    pooled_txt = _mm(pool_m, tok_ref[...])                          # (8, 128) exact mean
    txt_feat = _mm(pooled_txt, w_txt) + b_txt                       # (8, 128)

    # ---- both ProjectionHeads on a single stacked (16, 128) slab
    proj_img = _mm(img_feat, w1i_ref[...])                          # (8, 128)
    proj_txt = _mm(txt_feat, w1_txt)                                # (8, 128)
    projected = jnp.concatenate([proj_img, proj_txt], axis=0) + b1_st   # (16, 128)

    # exact (erf-based) GELU, matching nn.GELU() default
    h = 0.5 * projected * (1.0 + lax.erf(projected * (1.0 / math.sqrt(2.0))))
    fc2 = _mm(h, w2_cat)                                            # (16, 256)
    row = lax.broadcasted_iota(jnp.int32, (2 * b, p), 0)
    fc = jnp.where(row < b, fc2[:, 0:p], fc2[:, p:2 * p]) + b2_st   # pick diag blocks
    res = fc + projected                                            # residual
    mean = jnp.mean(res, axis=-1, keepdims=True)
    var = jnp.mean((res - mean) ** 2, axis=-1, keepdims=True)
    emb = (res - mean) * lax.rsqrt(var + LN_EPS) * gamma_st + beta_st   # (16, 128)

    # ---- CLIP loss: all three Gram blocks from ONE stacked MXU matmul
    g = lax.dot_general(emb, emb, (((1,), (1,)), ((), ())),
                        preferred_element_type=jnp.float32)         # (16, 16)
    img_sim = g[0:b, 0:b]
    txt_sim = g[b:2 * b, b:2 * b]
    logits = g[b:2 * b, 0:b]                                        # text @ image.T

    if TEMPERATURE != 1.0:                                          # folded at trace time
        logits = logits * (1.0 / TEMPERATURE)
        t = (img_sim + txt_sim) * (0.5 * TEMPERATURE)
    else:
        t = (img_sim + txt_sim) * 0.5

    # targets = softmax((img_sim + txt_sim) / 2 * T, dim=-1)   (exact divide)
    t = t - jnp.max(t, axis=-1, keepdims=True)
    et = jnp.exp(t)
    targets = et / jnp.sum(et, axis=-1, keepdims=True)

    def _row_log_softmax(z):
        zm = z - jnp.max(z, axis=-1, keepdims=True)
        return zm - jnp.log(jnp.sum(jnp.exp(zm), axis=-1, keepdims=True))

    ls_rows = _row_log_softmax(logits)        # texts_loss direction
    ls_cols = _row_log_softmax(logits.T)      # images_loss: reuse row path after 1 transpose

    texts_total = -jnp.sum(targets * ls_rows)
    images_total = -jnp.sum(targets.T * ls_cols)
    # loss.mean() == (sum texts_loss + sum images_loss) / (2 * B)
    loss_ref[0] = (texts_total + images_total) / (2.0 * b)


# ---------------------------- wrapper ----------------------------
def clip_forward(x_bcp, tok_flat, wimg_slab, w1_img, w128_slab, vec_slab):
    flat = (x_bcp, tok_flat, wimg_slab, w1_img, w128_slab, vec_slab)

    bytes_accessed = sum(int(a.size) * a.dtype.itemsize for a in flat) + 4
    flops = 2 * (BATCH * IMG_C * IMAGE_EMBEDDING
                 + BATCH * BATCH * SEQ * TEXT_EMBEDDING
                 + BATCH * TEXT_EMBEDDING * TEXT_EMBEDDING
                 + BATCH * IMAGE_EMBEDDING * PROJECTION_DIM
                 + BATCH * TEXT_EMBEDDING * PROJECTION_DIM
                 + 2 * BATCH * PROJECTION_DIM * 2 * PROJECTION_DIM
                 + 2 * BATCH * PROJECTION_DIM * 2 * BATCH)
    transcendentals = 2 * BATCH * PROJECTION_DIM + 6 * BATCH * BATCH

    out = pl.pallas_call(
        _clip_forward_kernel,
        out_shape=jax.ShapeDtypeStruct((1,), jnp.float32),
        in_specs=[pl.BlockSpec(memory_space=pltpu.MemorySpace.VMEM)] * len(flat),
        out_specs=pl.BlockSpec(memory_space=pltpu.MemorySpace.SMEM),  # scalar loss -> SMEM
        cost_estimate=pl.CostEstimate(flops=int(flops),
                                      transcendentals=int(transcendentals),
                                      bytes_accessed=int(bytes_accessed)),
    )(*flat)
    # TODO(synk): at real CFG scale (B>=32, image_embedding=2048, real backbones) add a
    #             batch grid with dimension_semantics=("parallel",) so v7x's two
    #             TensorCores share the work, and re-budget tiles against 64 MiB VMEM
    #             (set vmem_limit_bytes explicitly then). At this size a single
    #             grid-less call on one TensorCore is faster.
    return out[0]


# ---------------------------- pure-JAX reference ----------------------------
def _ref_projection_head(x, w1, b1, w2, b2, gamma, beta):
    projected = x @ w1 + b1
    h = 0.5 * projected * (1.0 + lax.erf(projected / math.sqrt(2.0)))
    h = h @ w2 + b2
    h = h + projected
    mean = h.mean(-1, keepdims=True)
    var = ((h - mean) ** 2).mean(-1, keepdims=True)
    return (h - mean) / jnp.sqrt(var + LN_EPS) * gamma + beta


def _ref_forward(x_bcp, tok_emb, mask, params):
    img_feat = x_bcp.mean(axis=-1) @ params["w_img"] + params["b_img"]
    pooled = (tok_emb * mask[:, :, None]).sum(1) / mask.sum(1, keepdims=True)
    txt_feat = pooled @ params["w_txt"] + params["b_txt"]
    img_emb = _ref_projection_head(img_feat, *params["img_proj"])
    txt_emb = _ref_projection_head(txt_feat, *params["txt_proj"])
    logits = txt_emb @ img_emb.T / TEMPERATURE
    targets = jax.nn.softmax((img_emb @ img_emb.T + txt_emb @ txt_emb.T) / 2 * TEMPERATURE,
                             axis=-1)
    texts_loss = (-targets * jax.nn.log_softmax(logits, axis=-1)).sum(1)
    images_loss = (-targets.T * jax.nn.log_softmax(logits.T, axis=-1)).sum(1)
    return ((images_loss + texts_loss) / 2.0).mean()


# ---------------------------- driver ----------------------------
def main():
    key = jax.random.PRNGKey(0)
    keys = jax.random.split(key, 16)

    # batch (PyTorch-style NCHW image, token ids, attention mask)
    image_nchw = jax.random.normal(keys[0], (BATCH, IMG_C, IMG_HW, IMG_HW), jnp.float32)
    input_ids = jax.random.randint(keys[1], (BATCH, SEQ), 0, VOCAB, dtype=jnp.int32)
    lengths = jax.random.randint(keys[2], (BATCH,), 4, SEQ + 1, dtype=jnp.int32)
    attention_mask = (jnp.arange(SEQ)[None, :] < lengths[:, None]).astype(jnp.float32)

    # deterministic parameters
    s = 0.02
    params = dict(
        w_img=s * jax.random.normal(keys[3], (IMG_C, IMAGE_EMBEDDING), jnp.float32),
        b_img=s * jax.random.normal(keys[4], (1, IMAGE_EMBEDDING), jnp.float32),
        emb_table=s * jax.random.normal(keys[5], (VOCAB, TEXT_EMBEDDING), jnp.float32),
        w_txt=s * jax.random.normal(keys[6], (TEXT_EMBEDDING, TEXT_EMBEDDING), jnp.float32),
        b_txt=s * jax.random.normal(keys[7], (1, TEXT_EMBEDDING), jnp.float32),
        img_proj=(
            s * jax.random.normal(keys[8], (IMAGE_EMBEDDING, PROJECTION_DIM), jnp.float32),
            s * jax.random.normal(keys[9], (1, PROJECTION_DIM), jnp.float32),
            s * jax.random.normal(keys[10], (PROJECTION_DIM, PROJECTION_DIM), jnp.float32),
            s * jax.random.normal(keys[11], (1, PROJECTION_DIM), jnp.float32),
            jnp.ones((1, PROJECTION_DIM), jnp.float32),
            jnp.zeros((1, PROJECTION_DIM), jnp.float32),
        ),
        txt_proj=(
            s * jax.random.normal(keys[12], (TEXT_EMBEDDING, PROJECTION_DIM), jnp.float32),
            s * jax.random.normal(keys[13], (1, PROJECTION_DIM), jnp.float32),
            s * jax.random.normal(keys[14], (PROJECTION_DIM, PROJECTION_DIM), jnp.float32),
            s * jax.random.normal(keys[15], (1, PROJECTION_DIM), jnp.float32),
            jnp.ones((1, PROJECTION_DIM), jnp.float32),
            jnp.zeros((1, PROJECTION_DIM), jnp.float32),
        ),
    )

    # ---- glue: lane-dense image view, embedding lookup, flattened tokens ----
    x_bcp = image_nchw.reshape(BATCH, IMG_C, IMG_HW * IMG_HW)        # (8, 16, 256), no transpose
    tok_emb = jnp.take(params["emb_table"], input_ids, axis=0)       # (8, 16, 128)
    tok_flat = tok_emb.reshape(BATCH * SEQ, TEXT_EMBEDDING)          # (128, 128)

    # masked-mean pooling matrix M[b, b*S+s] = mask[b,s] / len[b]  (exact, folded at prep time)
    denom = attention_mask.sum(axis=1, keepdims=True)                # (8, 1), >= 4
    scaled_mask = attention_mask / denom                             # (8, 16)
    eye = jnp.eye(BATCH, dtype=jnp.float32)
    pool_mat = (eye[:, :, None] * scaled_mask[None, :, :]).reshape(BATCH, BATCH * SEQ)  # (8,128)

    # ---- one-time parameter packing (cuts 21 prologue DMAs down to 6) ----
    wi1, bi1, wi2, bi2, gi, bei = params["img_proj"]
    wt1, bt1, wt2, bt2, gt, bet = params["txt_proj"]

    wimg_slab = jnp.concatenate(
        [params["w_img"] * (1.0 / (IMG_HW * IMG_HW)),                           # (16, 256)
         jnp.broadcast_to(params["b_img"], (BATCH, IMAGE_EMBEDDING))], axis=0)  # (24, 256)

    w128_slab = jnp.concatenate([params["w_txt"], wt1, wi2, wt2], axis=1)       # (128, 512)

    def _bc(v):
        return jnp.broadcast_to(v, (BATCH, v.shape[-1]))

    vec_slab = jnp.concatenate(
        [_bc(bi1), _bc(bt1), _bc(bi2), _bc(bt2),
         _bc(gi), _bc(gt), _bc(bei), _bc(bet),
         _bc(params["b_txt"]), pool_mat], axis=0)                               # (80, 128)

    # ---- fused Pallas forward pass (single kernel) ----
    loss = clip_forward(x_bcp, tok_flat, wimg_slab, wi1, w128_slab, vec_slab)
    loss = jax.block_until_ready(loss)

    # sanity check against pure-JAX reference (all kernel math is exact now)
    ref = _ref_forward(x_bcp, tok_emb, attention_mask, params)
    assert jnp.allclose(loss, ref, rtol=1e-3, atol=1e-3), (loss, ref)

    print("KERNEL_OK")


if __name__ == "__main__":
    main()
</pallas_src>

<mosaic_0001>
module attributes {stable_mosaic.version = 11 : i64} {
  func.func @_clip_forward_kernel(%arg0: memref<8x16x256xf32, #tpu.memory_space<vmem>>, %arg1: memref<128x128xf32, #tpu.memory_space<vmem>>, %arg2: memref<24x256xf32, #tpu.memory_space<vmem>>, %arg3: memref<256x128xf32, #tpu.memory_space<vmem>>, %arg4: memref<128x512xf32, #tpu.memory_space<vmem>>, %arg5: memref<80x128xf32, #tpu.memory_space<vmem>>, %arg6: memref<1xf32, #tpu.memory_space<smem>>) attributes {dimension_semantics = [], scalar_prefetch = 0 : i64, scratch_operands = 0 : i64, tpu.core_type = #tpu.core_type<tc>} {
    %c0 = arith.constant 0 : index
    %c0_0 = arith.constant 0 : index
    %0 = vector.load %arg2[%c0, %c0_0] : memref<24x256xf32, #tpu.memory_space<vmem>>, vector<16x256xf32>
    %c16 = arith.constant 16 : index
    %c0_1 = arith.constant 0 : index
    %1 = vector.load %arg2[%c16, %c0_1] : memref<24x256xf32, #tpu.memory_space<vmem>>, vector<8x256xf32>
    %c0_2 = arith.constant 0 : index
    %c0_3 = arith.constant 0 : index
    %2 = vector.load %arg4[%c0_2, %c0_3] : memref<128x512xf32, #tpu.memory_space<vmem>>, vector<128x128xf32>
    %c0_4 = arith.constant 0 : index
    %c128 = arith.constant 128 : index
    %3 = vector.load %arg4[%c0_4, %c128] : memref<128x512xf32, #tpu.memory_space<vmem>>, vector<128x128xf32>
    %c0_5 = arith.constant 0 : index
    %c256 = arith.constant 256 : index
    %4 = vector.load %arg4[%c0_5, %c256] : memref<128x512xf32, #tpu.memory_space<vmem>>, vector<128x256xf32>
    %c0_6 = arith.constant 0 : index
    %c0_7 = arith.constant 0 : index
    %5 = vector.load %arg5[%c0_6, %c0_7] : memref<80x128xf32, #tpu.memory_space<vmem>>, vector<16x128xf32>
    %c16_8 = arith.constant 16 : index
    %c0_9 = arith.constant 0 : index
    %6 = vector.load %arg5[%c16_8, %c0_9] : memref<80x128xf32, #tpu.memory_space<vmem>>, vector<16x128xf32>
    %c32 = arith.constant 32 : index
    %c0_10 = arith.constant 0 : index
    %7 = vector.load %arg5[%c32, %c0_10] : memref<80x128xf32, #tpu.memory_space<vmem>>, vector<16x128xf32>
    %c48 = arith.constant 48 : index
    %c0_11 = arith.constant 0 : index
    %8 = vector.load %arg5[%c48, %c0_11] : memref<80x128xf32, #tpu.memory_space<vmem>>, vector<16x128xf32>
    %c64 = arith.constant 64 : index
    %c0_12 = arith.constant 0 : index
    %9 = vector.load %arg5[%c64, %c0_12] : memref<80x128xf32, #tpu.memory_space<vmem>>, vector<8x128xf32>
    %c72 = arith.constant 72 : index
    %c0_13 = arith.constant 0 : index
    %10 = vector.load %arg5[%c72, %c0_13] : memref<80x128xf32, #tpu.memory_space<vmem>>, vector<8x128xf32>
    %c0_14 = arith.constant 0 : index
    %c0_15 = arith.constant 0 : index
    %c0_16 = arith.constant 0 : index
    %11 = vector.load %arg0[%c0_14, %c0_15, %c0_16] : memref<8x16x256xf32, #tpu.memory_space<vmem>>, vector<8x16x256xf32>
    %cst = arith.constant dense<0.000000e+00> : vector<8x16xf32>
    %12 = vector.multi_reduction <add>, %11, %cst [2] : vector<8x16x256xf32> to vector<8x16xf32>
    %cst_17 = arith.constant dense<0.000000e+00> : vector<8x256xf32>
    %13 = tpu.matmul %12, %0, %cst_17 {dimension_numbers = #tpu.dot_dimension_numbers<[1], [0], [0], [1], [0, 0, 1, 1], [], []>} : vector<8x16xf32>, vector<16x256xf32>, vector<8x256xf32> -> vector<8x256xf32>
    %14 = arith.addf %13, %1 : vector<8x256xf32>
    %c0_18 = arith.constant 0 : index
    %c0_19 = arith.constant 0 : index
    %15 = vector.load %arg1[%c0_18, %c0_19] : memref<128x128xf32, #tpu.memory_space<vmem>>, vector<128x128xf32>
    %cst_20 = arith.constant dense<0.000000e+00> : vector<8x128xf32>
    %16 = tpu.matmul %10, %15, %cst_20 {dimension_numbers = #tpu.dot_dimension_numbers<[1], [0], [0], [1], [0, 0, 1, 1], [], []>} : vector<8x128xf32>, vector<128x128xf32>, vector<8x128xf32> -> vector<8x128xf32>
    %cst_21 = arith.constant dense<0.000000e+00> : vector<8x128xf32>
    %17 = tpu.matmul %16, %2, %cst_21 {dimension_numbers = #tpu.dot_dimension_numbers<[1], [0], [0], [1], [0, 0, 1, 1], [], []>} : vector<8x128xf32>, vector<128x128xf32>, vector<8x128xf32> -> vector<8x128xf32>
    %18 = arith.addf %17, %9 : vector<8x128xf32>
    %c0_22 = arith.constant 0 : index
    %c0_23 = arith.constant 0 : index
    %19 = vector.load %arg3[%c0_22, %c0_23] : memref<256x128xf32, #tpu.memory_space<vmem>>, vector<256x128xf32>
    %cst_24 = arith.constant dense<0.000000e+00> : vector<8x128xf32>
    %20 = tpu.matmul %14, %19, %cst_24 {dimension_numbers = #tpu.dot_dimension_numbers<[1], [0], [0], [1], [0, 0, 1, 1], [], []>} : vector<8x256xf32>, vector<256x128xf32>, vector<8x128xf32> -> vector<8x128xf32>
    %cst_25 = arith.constant dense<0.000000e+00> : vector<8x128xf32>
    %21 = tpu.matmul %18, %3, %cst_25 {dimension_numbers = #tpu.dot_dimension_numbers<[1], [0], [0], [1], [0, 0, 1, 1], [], []>} : vector<8x128xf32>, vector<128x128xf32>, vector<8x128xf32> -> vector<8x128xf32>
    %22 = tpu.concatenate %20, %21 in 0 : vector<8x128xf32>, vector<8x128xf32> -> vector<16x128xf32>
    %23 = arith.addf %22, %5 : vector<16x128xf32>
    %cst_26 = arith.constant 5.000000e-01 : f32
    %24 = vector.broadcast %cst_26 : f32 to vector<16x128xf32>
    %25 = arith.mulf %24, %23 : vector<16x128xf32>
    %cst_27 = arith.constant 0.707106769 : f32
    %26 = vector.broadcast %cst_27 : f32 to vector<16x128xf32>
    %27 = arith.mulf %23, %26 : vector<16x128xf32>
    %28 = math.erf %27 : vector<16x128xf32>
    %cst_28 = arith.constant 1.000000e+00 : f32
    %29 = vector.broadcast %cst_28 : f32 to vector<16x128xf32>
    %30 = arith.addf %29, %28 : vector<16x128xf32>
    %31 = arith.mulf %25, %30 : vector<16x128xf32>
    %cst_29 = arith.constant dense<0.000000e+00> : vector<16x256xf32>
    %32 = tpu.matmul %31, %4, %cst_29 {dimension_numbers = #tpu.dot_dimension_numbers<[1], [0], [0], [1], [0, 0, 1, 1], [], []>} : vector<16x128xf32>, vector<128x256xf32>, vector<16x256xf32> -> vector<16x256xf32>
    %33 = tpu.iota {dimensions = array<i32: 0>} : vector<16x128xi32>
    %c8_i32 = arith.constant 8 : i32
    %34 = vector.broadcast %c8_i32 : i32 to vector<16x128xi32>
    %35 = arith.cmpi slt, %33, %34 : vector<16x128xi32>
    %36 = vector.extract_strided_slice %32 {offsets = [0, 0], sizes = [16, 128], strides = [1, 1]} : vector<16x256xf32> to vector<16x128xf32>
    %37 = vector.extract_strided_slice %32 {offsets = [0, 128], sizes = [16, 128], strides = [1, 1]} : vector<16x256xf32> to vector<16x128xf32>
    %38 = arith.select %35, %36, %37 : vector<16x128xi1>, vector<16x128xf32>
    %39 = arith.addf %38, %6 : vector<16x128xf32>
    %40 = arith.addf %39, %23 : vector<16x128xf32>
    %cst_30 = arith.constant dense<0.000000e+00> : vector<16xf32>
    %41 = vector.multi_reduction <add>, %40, %cst_30 [1] : vector<16x128xf32> to vector<16xf32>
    %42 = vector.shape_cast %41 : vector<16xf32> to vector<16x1xf32>
    %cst_31 = arith.constant 1.280000e+02 : f32
    %43 = vector.broadcast %cst_31 : f32 to vector<16x1xf32>
    %44 = arith.divf %42, %43 : vector<16x1xf32>
    %45 = vector.broadcast %44 : vector<16x1xf32> to vector<16x128xf32>
    %46 = arith.subf %40, %45 : vector<16x128xf32>
    %47 = arith.mulf %46, %46 : vector<16x128xf32>
    %cst_32 = arith.constant dense<0.000000e+00> : vector<16xf32>
    %48 = vector.multi_reduction <add>, %47, %cst_32 [1] : vector<16x128xf32> to vector<16xf32>
    %49 = vector.shape_cast %48 : vector<16xf32> to vector<16x1xf32>
    %cst_33 = arith.constant 1.280000e+02 : f32
    %50 = vector.broadcast %cst_33 : f32 to vector<16x1xf32>
    %51 = arith.divf %49, %50 : vector<16x1xf32>
    %52 = vector.broadcast %44 : vector<16x1xf32> to vector<16x128xf32>
    %53 = arith.subf %40, %52 : vector<16x128xf32>
    %cst_34 = arith.constant 9.99999974E-6 : f32
    %54 = vector.broadcast %cst_34 : f32 to vector<16x1xf32>
    %55 = arith.addf %51, %54 : vector<16x1xf32>
    %56 = math.rsqrt %55 : vector<16x1xf32>
    %57 = vector.broadcast %56 : vector<16x1xf32> to vector<16x128xf32>
    %58 = arith.mulf %53, %57 : vector<16x128xf32>
    %59 = arith.mulf %58, %7 : vector<16x128xf32>
    %60 = arith.addf %59, %8 : vector<16x128xf32>
    %cst_35 = arith.constant dense<0.000000e+00> : vector<16x16xf32>
    %61 = tpu.matmul %60, %60, %cst_35 {dimension_numbers = #tpu.dot_dimension_numbers<[1], [1], [0], [0], [0, 0, 1, 0], [], []>} : vector<16x128xf32>, vector<16x128xf32>, vector<16x16xf32> -> vector<16x16xf32>
    %62 = vector.extract_strided_slice %61 {offsets = [0, 0], sizes = [8, 8], strides = [1, 1]} : vector<16x16xf32> to vector<8x8xf32>
    %63 = vector.extract_strided_slice %61 {offsets = [8, 8], sizes = [8, 8], strides = [1, 1]} : vector<16x16xf32> to vector<8x8xf32>
    %64 = vector.extract_strided_slice %61 {offsets = [8, 0], sizes = [8, 8], strides = [1, 1]} : vector<16x16xf32> to vector<8x8xf32>
    %65 = arith.addf %62, %63 : vector<8x8xf32>
    %cst_36 = arith.constant 5.000000e-01 : f32
    %66 = vector.broadcast %cst_36 : f32 to vector<8x8xf32>
    %67 = arith.mulf %65, %66 : vector<8x8xf32>
    %cst_37 = arith.constant dense<0xFF800000> : vector<8xf32>
    %68 = vector.multi_reduction <maximumf>, %67, %cst_37 [1] : vector<8x8xf32> to vector<8xf32>
    %69 = vector.shape_cast %68 : vector<8xf32> to vector<8x1xf32>
    %70 = vector.broadcast %69 : vector<8x1xf32> to vector<8x8xf32>
    %71 = arith.subf %67, %70 : vector<8x8xf32>
    %72 = math.exp %71 : vector<8x8xf32>
    %cst_38 = arith.constant dense<0.000000e+00> : vector<8xf32>
    %73 = vector.multi_reduction <add>, %72, %cst_38 [1] : vector<8x8xf32> to vector<8xf32>
    %74 = vector.shape_cast %73 : vector<8xf32> to vector<8x1xf32>
    %75 = vector.broadcast %74 : vector<8x1xf32> to vector<8x8xf32>
    %76 = arith.divf %72, %75 : vector<8x8xf32>
    %cst_39 = arith.constant dense<0xFF800000> : vector<8xf32>
    %77 = vector.multi_reduction <maximumf>, %64, %cst_39 [1] : vector<8x8xf32> to vector<8xf32>
    %78 = vector.shape_cast %77 : vector<8xf32> to vector<8x1xf32>
    %79 = vector.broadcast %78 : vector<8x1xf32> to vector<8x8xf32>
    %80 = arith.subf %64, %79 : vector<8x8xf32>
    %81 = math.exp %80 : vector<8x8xf32>
    %cst_40 = arith.constant dense<0.000000e+00> : vector<8xf32>
    %82 = vector.multi_reduction <add>, %81, %cst_40 [1] : vector<8x8xf32> to vector<8xf32>
    %83 = vector.shape_cast %82 : vector<8xf32> to vector<8x1xf32>
    %84 = math.log %83 : vector<8x1xf32>
    %85 = vector.broadcast %84 : vector<8x1xf32> to vector<8x8xf32>
    %86 = arith.subf %80, %85 : vector<8x8xf32>
    %87 = tpu.transpose %64, [1, 0] : vector<8x8xf32> -> vector<8x8xf32>
    %cst_41 = arith.constant dense<0xFF800000> : vector<8xf32>
    %88 = vector.multi_reduction <maximumf>, %87, %cst_41 [1] : vector<8x8xf32> to vector<8xf32>
    %89 = vector.shape_cast %88 : vector<8xf32> to vector<8x1xf32>
    %90 = vector.broadcast %89 : vector<8x1xf32> to vector<8x8xf32>
    %91 = arith.subf %87, %90 : vector<8x8xf32>
    %92 = math.exp %91 : vector<8x8xf32>
    %cst_42 = arith.constant dense<0.000000e+00> : vector<8xf32>
    %93 = vector.multi_reduction <add>, %92, %cst_42 [1] : vector<8x8xf32> to vector<8xf32>
    %94 = vector.shape_cast %93 : vector<8xf32> to vector<8x1xf32>
    %95 = math.log %94 : vector<8x1xf32>
    %96 = vector.broadcast %95 : vector<8x1xf32> to vector<8x8xf32>
    %97 = arith.subf %91, %96 : vector<8x8xf32>
    %98 = arith.mulf %76, %86 : vector<8x8xf32>
    %99 = vector.shape_cast %98 : vector<8x8xf32> to vector<1x8x8xf32>
    %cst_43 = arith.constant dense<0.000000e+00> : vector<1xf32>
    %100 = vector.multi_reduction <add>, %99, %cst_43 [1, 2] : vector<1x8x8xf32> to vector<1xf32>
    %101 = vector.shape_cast %100 : vector<1xf32> to vector<1x1x1xf32>
    %102 = vector.extract %101[0, 0, 0] : f32 from vector<1x1x1xf32>
    %cst_44 = arith.constant 0.000000e+00 : f32
    %103 = arith.subf %cst_44, %102 : f32
    %104 = tpu.transpose %76, [1, 0] : vector<8x8xf32> -> vector<8x8xf32>
    %105 = arith.mulf %104, %97 : vector<8x8xf32>
    %106 = vector.shape_cast %105 : vector<8x8xf32> to vector<1x8x8xf32>
    %cst_45 = arith.constant dense<0.000000e+00> : vector<1xf32>
    %107 = vector.multi_reduction <add>, %106, %cst_45 [1, 2] : vector<1x8x8xf32> to vector<1xf32>
    %108 = vector.shape_cast %107 : vector<1xf32> to vector<1x1x1xf32>
    %109 = vector.extract %108[0, 0, 0] : f32 from vector<1x1x1xf32>
    %cst_46 = arith.constant 0.000000e+00 : f32
    %110 = arith.subf %cst_46, %109 : f32
    %111 = arith.addf %103, %110 : f32
    %cst_47 = arith.constant 1.600000e+01 : f32
    %112 = arith.divf %111, %cst_47 : f32
    %c0_48 = arith.constant 0 : index
    %113 = memref.load %arg6[%c0_48] : memref<1xf32, #tpu.memory_space<smem>>
    memref.store %112, %arg6[%c0_48] : memref<1xf32, #tpu.memory_space<smem>>
    return
  }
}

</mosaic_0001>

<llo_original>
// kernel: tpu_custom_call.1
$region0: #{tpu_custom_call.1}
  #allocation0 [shape = 'u32[]', space=smem, size = 0x4, offset = 0x4, fixed_abs, tag = 'smem constant byte address 0x4 - core index']
  #allocation1 [shape = 'u32[144,128]{1,0:T(1,128)}', space=vmem, size = 0x12000, scoped, tag = 'internal scratch']
  %s0 = inlined_call_operand.hbm [shape: f32[8,16,256], index: 0, kind: input, shape index: {}]
  %s1 = inlined_call_operand.hbm [shape: f32[128,128], index: 1, kind: input, shape index: {}]
  %s2 = inlined_call_operand.hbm [shape: f32[24,256], index: 2, kind: input, shape index: {}]
  %s3 = inlined_call_operand.hbm [shape: f32[256,128], index: 3, kind: input, shape index: {}]
  %s4 = inlined_call_operand.hbm [shape: f32[128,512], index: 4, kind: input, shape index: {}]
  %s5 = inlined_call_operand.hbm [shape: f32[80,128], index: 5, kind: input, shape index: {}]
  %s6 = inlined_call_operand.hbm [shape: f32[1], index: 6, kind: output, shape index: {}]
  %s7 = sld [smem:[#allocation0]]
  $region58: #{tpu_custom_call.1} parent=0
    _
  %s9 = ssub.s32 1, %s7
  %s10 = scalar_select 0, %s9, %s7
  $region1: #{tpu_custom_call.1} parent=0
    #allocation2 [shape = 'u8[131072]{0}', space=vmem, size = 0x20000, scoped, tag = 'input window, operand 0, single buffered']
    #allocation3 [shape = 's32[1]{0}', space=sflag, size = 0x4, scoped, tag = 'scoped memory for tpu_custom_call.1']
    #allocation4 [shape = 's32[1]{0}', space=sflag, size = 0x4, scoped, tag = 'scoped memory for tpu_custom_call.1']
    #allocation5 [shape = 'u8[65536]{0}', space=vmem, size = 0x10000, scoped, tag = 'input window, operand 1, single buffered']
    #allocation6 [shape = 's32[1]{0}', space=sflag, size = 0x4, scoped, tag = 'scoped memory for tpu_custom_call.1']
    #allocation7 [shape = 'u8[24576]{0}', space=vmem, size = 0x6000, scoped, tag = 'input window, operand 2, single buffered']
    #allocation8 [shape = 'u8[131072]{0}', space=vmem, size = 0x20000, scoped, tag = 'input window, operand 3, single buffered']
    #allocation9 [shape = 's32[1]{0}', space=sflag, size = 0x4, scoped, tag = 'scoped memory for tpu_custom_call.1']
    #allocation10 [shape = 'u8[262144]{0}', space=vmem, size = 0x40000, scoped, tag = 'input window, operand 4, single buffered']
    #allocation11 [shape = 'u8[40960]{0}', space=vmem, size = 0xa000, scoped, tag = 'input window, operand 5, single buffered']
    #allocation12 [shape = 's32[1]{0}', space=sflag, size = 0x4, scoped, tag = 'scoped memory for tpu_custom_call.1']
    #allocation13 [shape = 'u8[512]{0}', space=smem, size = 0x200, scoped, tag = 'output window, operand 0, single buffered']
    %11 = vsyncpa [#allocation3], 0
    %12 = vsyncpa [#allocation6], 0
    %13 = vsyncpa [#allocation9], 0
    %14 = vsyncpa [#allocation12], 0
    %15 = vsyncpa [#allocation4], 0
    // Predicated region
    $region2: #{tpu_custom_call.1} parent=1 // pred_check
      _
    $region3: #{tpu_custom_call.1} parent=1 // pred_check_branch
      %17 = sbr.rel (0) target = $region5
    $region4: #{tpu_custom_call.1} parent=1 // pred_region
      %s19 = ssub.s32 4096, 4096
      %20 = vsyncadd [#allocation3], %s19
      %s21 = sshll.u32 [#allocation2], 4
      %s22 = int_to_ptr.vmem [resolvable:$true] %s21
      %27 = dma.hbm_to_vmem [thread:$0]  %s0, 4096, %s22, [#allocation3], 256, 256, 16
    $region5: #{tpu_custom_call.1} parent=1 // pred_fallthru
      _
    // Predicated region
    $region6: #{tpu_custom_call.1} parent=1 // pred_check
      _
    $region7: #{tpu_custom_call.1} parent=1 // pred_check_branch
      %29 = sbr.rel (0) target = $region9
    $region8: #{tpu_custom_call.1} parent=1 // pred_region
      %s31 = ssub.s32 2048, 2048
      %32 = vsyncadd [#allocation6], %s31
      %s33 = sshll.u32 [#allocation5], 4
      %s34 = int_to_ptr.vmem [resolvable:$true] %s33
      %39 = dma.hbm_to_vmem [thread:$0]  %s1, 2048, %s34, [#allocation6], 128, 128, 8
    $region9: #{tpu_custom_call.1} parent=1 // pred_fallthru
      _
    // Predicated region
    $region10: #{tpu_custom_call.1} parent=1 // pred_check
      _
    $region11: #{tpu_custom_call.1} parent=1 // pred_check_branch
      %41 = sbr.rel (0) target = $region13
    $region12: #{tpu_custom_call.1} parent=1 // pred_region
      %s43 = ssub.s32 768, 768
      %44 = vsyncadd [#allocation6], %s43
      %s45 = sshll.u32 [#allocation7], 4
      %s46 = int_to_ptr.vmem [resolvable:$true] %s45
      %51 = dma.hbm_to_vmem [thread:$0]  %s2, 768, %s46, [#allocation6], 256, 256, 16
    $region13: #{tpu_custom_call.1} parent=1 // pred_fallthru
      _
    // Predicated region
    $region14: #{tpu_custom_call.1} parent=1 // pred_check
      _
    $region15: #{tpu_custom_call.1} parent=1 // pred_check_branch
      %53 = sbr.rel (0) target = $region17
    $region16: #{tpu_custom_call.1} parent=1 // pred_region
      %s55 = ssub.s32 4096, 4096
      %56 = vsyncadd [#allocation9], %s55
      %s57 = sshll.u32 [#allocation8], 4
      %s58 = int_to_ptr.vmem [resolvable:$true] %s57
      %63 = dma.hbm_to_vmem [thread:$0]  %s3, 4096, %s58, [#allocation9], 128, 128, 8
    $region17: #{tpu_custom_call.1} parent=1 // pred_fallthru
      _
    // Predicated region
    $region18: #{tpu_custom_call.1} parent=1 // pred_check
      _
    $region19: #{tpu_custom_call.1} parent=1 // pred_check_branch
      %65 = sbr.rel (0) target = $region21
    $region20: #{tpu_custom_call.1} parent=1 // pred_region
      %s67 = ssub.s32 8192, 8192
      %68 = vsyncadd [#allocation9], %s67
      %s69 = sshll.u32 [#allocation10], 4
      %s70 = int_to_ptr.vmem [resolvable:$true] %s69
      %75 = dma.hbm_to_vmem [thread:$0]  %s4, 8192, %s70, [#allocation9], 512, 512, 32
    $region21: #{tpu_custom_call.1} parent=1 // pred_fallthru
      _
    // Predicated region
    $region22: #{tpu_custom_call.1} parent=1 // pred_check
      _
    $region23: #{tpu_custom_call.1} parent=1 // pred_check_branch
      %77 = sbr.rel (0) target = $region25
    $region24: #{tpu_custom_call.1} parent=1 // pred_region
      %s79 = ssub.s32 1280, 1280
      %80 = vsyncadd [#allocation12], %s79
      %s81 = sshll.u32 [#allocation11], 4
      %s82 = int_to_ptr.vmem [resolvable:$true] %s81
      %87 = dma.hbm_to_vmem [thread:$0]  %s5, 1280, %s82, [#allocation12], 128, 128, 8
    $region25: #{tpu_custom_call.1} parent=1 // pred_fallthru
      _
    // Predicated region
    $region26: #{tpu_custom_call.1} parent=1 // pred_check
      _
    $region27: #{tpu_custom_call.1} parent=1 // pred_check_branch
      %89 = sbr.rel (0) target = $region29
    $region28: #{tpu_custom_call.1} parent=1 // pred_region
      %90 = dma.done [#allocation3], 4096
    $region29: #{tpu_custom_call.1} parent=1 // pred_fallthru
      _
    // Predicated region
    $region30: #{tpu_custom_call.1} parent=1 // pred_check
      _
    $region31: #{tpu_custom_call.1} parent=1 // pred_check_branch
      %92 = sbr.rel (0) target = $region33
    $region32: #{tpu_custom_call.1} parent=1 // pred_region
      %93 = dma.done [#allocation6], 2048
    $region33: #{tpu_custom_call.1} parent=1 // pred_fallthru
      _
    // Predicated region
    $region34: #{tpu_custom_call.1} parent=1 // pred_check
      _
    $region35: #{tpu_custom_call.1} parent=1 // pred_check_branch
      %95 = sbr.rel (0) target = $region37
    $region36: #{tpu_custom_call.1} parent=1 // pred_region
      %96 = dma.done [#allocation6], 768
    $region37: #{tpu_custom_call.1} parent=1 // pred_fallthru
      _
    // Predicated region
    $region38: #{tpu_custom_call.1} parent=1 // pred_check
      _
    $region39: #{tpu_custom_call.1} parent=1 // pred_check_branch
      %98 = sbr.rel (0) target = $region41
    $region40: #{tpu_custom_call.1} parent=1 // pred_region
      %99 = dma.done [#allocation9], 4096
    $region41: #{tpu_custom_call.1} parent=1 // pred_fallthru
      _
    // Predicated region
    $region42: #{tpu_custom_call.1} parent=1 // pred_check
      _
    $region43: #{tpu_custom_call.1} parent=1 // pred_check_branch
      %101 = sbr.rel (0) target = $region45
    $region44: #{tpu_custom_call.1} parent=1 // pred_region
      %102 = dma.done [#allocation9], 8192
    $region45: #{tpu_custom_call.1} parent=1 // pred_fallthru
      _
    // Predicated region
    $region46: #{tpu_custom_call.1} parent=1 // pred_check
      _
    $region47: #{tpu_custom_call.1} parent=1 // pred_check_branch
      %104 = sbr.rel (0) target = $region49
    $region48: #{tpu_custom_call.1} parent=1 // pred_region
      %105 = dma.done [#allocation12], 1280
    $region49: #{tpu_custom_call.1} parent=1 // pred_fallthru
      _
    %v106 = vld [vmem:[#allocation7] sm:$0xff]
    %v107 = vld [vmem:[#allocation7 + $0x8] sm:$0xff]
    %v108 = vld [vmem:[#allocation7 + $0x10] sm:$0xff]
    %v109 = vld [vmem:[#allocation7 + $0x18] sm:$0xff]
    %v110 = vld [vmem:[#allocation7 + $0x20] sm:$0xff]
    %v111 = vld [vmem:[#allocation7 + $0x28] sm:$0xff]
    %v112 = vld [vmem:[#allocation10] sm:$0xff]
    %v113 = vld [vmem:[#allocation10 + $0x20] sm:$0xff]
    %v114 = vld [vmem:[#allocation10 + $0x40] sm:$0xff]
    %v115 = vld [vmem:[#allocation10 + $0x60] sm:$0xff]
    %v116 = vld [vmem:[#allocation10 + $0x80] sm:$0xff]
    %v117 = vld [vmem:[#allocation10 + $0xa0] sm:$0xff]
    %v118 = vld [vmem:[#allocation10 + $0xc0] sm:$0xff]
    %v119 = vld [vmem:[#allocation10 + $0xe0] sm:$0xff]
    %v120 = vld [vmem:[#allocation10 + $0x100] sm:$0xff]
    %v121 = vld [vmem:[#allocation10 + $0x120] sm:$0xff]
    %v122 = vld [vmem:[#allocation10 + $0x140] sm:$0xff]
    %v123 = vld [vmem:[#allocation10 + $0x160] sm:$0xff]
    %v124 = vld [vmem:[#allocation10 + $0x180] sm:$0xff]
    %v125 = vld [vmem:[#allocation10 + $0x1a0] sm:$0xff]
    %v126 = vld [vmem:[#allocation10 + $0x1c0] sm:$0xff]
    %v127 = vld [vmem:[#allocation10 + $0x1e0] sm:$0xff]
    %v128 = vld [vmem:[#allocation10 + $0x8] sm:$0xff]
    %v129 = vld [vmem:[#allocation10 + $0x28] sm:$0xff]
    %v130 = vld [vmem:[#allocation10 + $0x48] sm:$0xff]
    %v131 = vld [vmem:[#allocation10 + $0x68] sm:$0xff]
    %v132 = vld [vmem:[#allocation10 + $0x88] sm:$0xff]
    %v133 = vld [vmem:[#allocation10 + $0xa8] sm:$0xff]
    %v134 = vld [vmem:[#allocation10 + $0xc8] sm:$0xff]
    %v135 = vld [vmem:[#allocation10 + $0xe8] sm:$0xff]
    %v136 = vld [vmem:[#allocation10 + $0x108] sm:$0xff]
    %v137 = vld [vmem:[#allocation10 + $0x128] sm:$0xff]
    %v138 = vld [vmem:[#allocation10 + $0x148] sm:$0xff]
    %v139 = vld [vmem:[#allocation10 + $0x168] sm:$0xff]
    %v140 = vld [vmem:[#allocation10 + $0x188] sm:$0xff]
    %v141 = vld [vmem:[#allocation10 + $0x1a8] sm:$0xff]
    %v142 = vld [vmem:[#allocation10 + $0x1c8] sm:$0xff]
    %v143 = vld [vmem:[#allocation10 + $0x1e8] sm:$0xff]
    %v144 = vld [vmem:[#allocation10 + $0x10] sm:$0xff]
    %v145 = vld [vmem:[#allocation10 + $0x18] sm:$0xff]
    %v146 = vld [vmem:[#allocation10 + $0x30] sm:$0xff]
    %v147 = vld [vmem:[#allocation10 + $0x38] sm:$0xff]
    %v148 = vld [vmem:[#allocation10 + $0x50] sm:$0xff]
    %v149 = vld [vmem:[#allocation10 + $0x58] sm:$0xff]
    %v150 = vld [vmem:[#allocation10 + $0x70] sm:$0xff]
    %v151 = vld [vmem:[#allocation10 + $0x78] sm:$0xff]
    %v152 = vld [vmem:[#allocation10 + $0x90] sm:$0xff]
    %v153 = vld [vmem:[#allocation10 + $0x98] sm:$0xff]
    %v154 = vld [vmem:[#allocation10 + $0xb0] sm:$0xff]
    %v155 = vld [vmem:[#allocation10 + $0xb8] sm:$0xff]
    %v156 = vld [vmem:[#allocation10 + $0xd0] sm:$0xff]
    %v157 = vld [vmem:[#allocation10 + $0xd8] sm:$0xff]
    %v158 = vld [vmem:[#allocation10 + $0xf0] sm:$0xff]
    %v159 = vld [vmem:[#allocation10 + $0xf8] sm:$0xff]
    %v160 = vld [vmem:[#allocation10 + $0x110] sm:$0xff]
    %v161 = vld [vmem:[#allocation10 + $0x118] sm:$0xff]
    %v162 = vld [vmem:[#allocation10 + $0x130] sm:$0xff]
    %v163 = vld [vmem:[#allocation10 + $0x138] sm:$0xff]
    %v164 = vld [vmem:[#allocation10 + $0x150] sm:$0xff]
    %v165 = vld [vmem:[#allocation10 + $0x158] sm:$0xff]
    %v166 = vld [vmem:[#allocation10 + $0x170] sm:$0xff]
    %v167 = vld [vmem:[#allocation10 + $0x178] sm:$0xff]
    %v168 = vld [vmem:[#allocation10 + $0x190] sm:$0xff]
    %v169 = vld [vmem:[#allocation10 + $0x198] sm:$0xff]
    %v170 = vld [vmem:[#allocation10 + $0x1b0] sm:$0xff]
    %v171 = vld [vmem:[#allocation10 + $0x1b8] sm:$0xff]
    %v172 = vld [vmem:[#allocation10 + $0x1d0] sm:$0xff]
    %v173 = vld [vmem:[#allocation10 + $0x1d8] sm:$0xff]
    %v174 = vld [vmem:[#allocation10 + $0x1f0] sm:$0xff]
    %v175 = vld [vmem:[#allocation10 + $0x1f8] sm:$0xff]
    %v176 = vld [vmem:[#allocation11] sm:$0xff]
    %v177 = vld [vmem:[#allocation11 + $0x8] sm:$0xff]
    %v178 = vld [vmem:[#allocation11 + $0x10] sm:$0xff]
    %v179 = vld [vmem:[#allocation11 + $0x18] sm:$0xff]
    %v180 = vld [vmem:[#allocation11 + $0x20] sm:$0xff]
    %v181 = vld [vmem:[#allocation11 + $0x28] sm:$0xff]
    %v182 = vld [vmem:[#allocation11 + $0x30] sm:$0xff]
    %v183 = vld [vmem:[#allocation11 + $0x38] sm:$0xff]
    %v184 = vld [vmem:[#allocation11 + $0x40] sm:$0xff]
    %v185 = vld [vmem:[#allocation11 + $0x48] sm:$0xff]
    %v186 = vld [vmem:[#allocation2] sm:$0xff]
    %v187 = vld [vmem:[#allocation2 + $0x8] sm:$0xff]
    %v188 = vld [vmem:[#allocation2 + $0x10] sm:$0xff]
    %v189 = vld [vmem:[#allocation2 + $0x18] sm:$0xff]
    %v190 = vld [vmem:[#allocation2 + $0x20] sm:$0xff]
    %v191 = vld [vmem:[#allocation2 + $0x28] sm:$0xff]
    %v192 = vld [vmem:[#allocation2 + $0x30] sm:$0xff]
    %v193 = vld [vmem:[#allocation2 + $0x38] sm:$0xff]
    %v194 = vld [vmem:[#allocation2 + $0x40] sm:$0xff]
    %v195 = vld [vmem:[#allocation2 + $0x48] sm:$0xff]
    %v196 = vld [vmem:[#allocation2 + $0x50] sm:$0xff]
    %v197 = vld [vmem:[#allocation2 + $0x58] sm:$0xff]
    %v198 = vld [vmem:[#allocation2 + $0x60] sm:$0xff]
    %v199 = vld [vmem:[#allocation2 + $0x68] sm:$0xff]
    %v200 = vld [vmem:[#allocation2 + $0x70] sm:$0xff]
    %v201 = vld [vmem:[#allocation2 + $0x78] sm:$0xff]
    %v202 = vld [vmem:[#allocation2 + $0x80] sm:$0xff]
    %v203 = vld [vmem:[#allocation2 + $0x88] sm:$0xff]
    %v204 = vld [vmem:[#allocation2 + $0x90] sm:$0xff]
    %v205 = vld [vmem:[#allocation2 + $0x98] sm:$0xff]
    %v206 = vld [vmem:[#allocation2 + $0xa0] sm:$0xff]
    %v207 = vld [vmem:[#allocation2 + $0xa8] sm:$0xff]
    %v208 = vld [vmem:[#allocation2 + $0xb0] sm:$0xff]
    %v209 = vld [vmem:[#allocation2 + $0xb8] sm:$0xff]
    %v210 = vld [vmem:[#allocation2 + $0xc0] sm:$0xff]
    %v211 = vld [vmem:[#allocation2 + $0xc8] sm:$0xff]
    %v212 = vld [vmem:[#allocation2 + $0xd0] sm:$0xff]
    %v213 = vld [vmem:[#allocation2 + $0xd8] sm:$0xff]
    %v214 = vld [vmem:[#allocation2 + $0xe0] sm:$0xff]
    %v215 = vld [vmem:[#allocation2 + $0xe8] sm:$0xff]
    %v216 = vld [vmem:[#allocation2 + $0xf0] sm:$0xff]
    %v217 = vld [vmem:[#allocation2 + $0xf8] sm:$0xff]
    %v218 = vadd.f32 %v186, %v187
    %219 = vadd.xlane.f32.xlu0 %v218
    %v220 = vpop.xlane.xlu0 %219
    %v221 = vadd.f32 %v188, %v189
    %222 = vadd.xlane.f32.xlu0 %v221
    %v223 = vpop.xlane.xlu0 %222
    %v224 = vadd.f32 %v190, %v191
    %225 = vadd.xlane.f32.xlu0 %v224
    %v226 = vpop.xlane.xlu0 %225
    %v227 = vadd.f32 %v192, %v193
    %228 = vadd.xlane.f32.xlu0 %v227
    %v229 = vpop.xlane.xlu0 %228
    %v230 = vadd.f32 %v194, %v195
    %231 = vadd.xlane.f32.xlu0 %v230
    %v232 = vpop.xlane.xlu0 %231
    %v233 = vadd.f32 %v196, %v197
    %234 = vadd.xlane.f32.xlu0 %v233
    %v235 = vpop.xlane.xlu0 %234
    %v236 = vadd.f32 %v198, %v199
    %237 = vadd.xlane.f32.xlu0 %v236
    %v238 = vpop.xlane.xlu0 %237
    %v239 = vadd.f32 %v200, %v201
    %240 = vadd.xlane.f32.xlu0 %v239
    %v241 = vpop.xlane.xlu0 %240
    %v242 = vadd.f32 %v202, %v203
    %243 = vadd.xlane.f32.xlu0 %v242
    %v244 = vpop.xlane.xlu0 %243
    %v245 = vadd.f32 %v204, %v205
    %246 = vadd.xlane.f32.xlu0 %v245
    %v247 = vpop.xlane.xlu0 %246
    %v248 = vadd.f32 %v206, %v207
    %249 = vadd.xlane.f32.xlu0 %v248
    %v250 = vpop.xlane.xlu0 %249
    %v251 = vadd.f32 %v208, %v209
    %252 = vadd.xlane.f32.xlu0 %v251
    %v253 = vpop.xlane.xlu0 %252
    %v254 = vadd.f32 %v210, %v211
    %255 = vadd.xlane.f32.xlu0 %v254
    %v256 = vpop.xlane.xlu0 %255
    %v257 = vadd.f32 %v212, %v213
    %258 = vadd.xlane.f32.xlu0 %v257
    %v259 = vpop.xlane.xlu0 %258
    %v260 = vadd.f32 %v214, %v215
    %261 = vadd.xlane.f32.xlu0 %v260
    %v262 = vpop.xlane.xlu0 %261
    %v263 = vadd.f32 %v216, %v217
    %264 = vadd.xlane.f32.xlu0 %v263
    %v265 = vpop.xlane.xlu0 %264
    %v282 = vlaneseq
    %v283 = vand.u32 %v282, 127
    %v284 = vlaneseq
    %v285 = vshrl.u32 %v284, 7
    %v286 = vsub.s32 %v283, %v285
    %v287 = vrot.slane %v220, %v286
    %v288 = vadd.s32 %v283, 4294967288
    %v289 = vlaneseq
    %v290 = vshrl.u32 %v289, 7
    %v291 = vsub.s32 %v288, %v290
    %v292 = vrot.slane %v223, %v291
    %vm293 = vcmask 130112
    %v294 = vsel %vm293, %v292, %v287
    %v295 = vlaneseq
    %v296 = vshrl.u32 %v295, 7
    %v297 = vsub.s32 %v283, %v296
    %v298 = vrot.slane %v226, %v297
    %v299 = vlaneseq
    %v300 = vshrl.u32 %v299, 7
    %v301 = vsub.s32 %v288, %v300
    %v302 = vrot.slane %v229, %v301
    %v303 = vsel %vm293, %v302, %v298
    %v304 = vlaneseq
    %v305 = vshrl.u32 %v304, 7
    %v306 = vsub.s32 %v283, %v305
    %v307 = vrot.slane %v232, %v306
    %v308 = vlaneseq
    %v309 = vshrl.u32 %v308, 7
    %v310 = vsub.s32 %v288, %v309
    %v311 = vrot.slane %v235, %v310
    %v312 = vsel %vm293, %v311, %v307
    %v313 = vlaneseq
    %v314 = vshrl.u32 %v313, 7
    %v315 = vsub.s32 %v283, %v314
    %v316 = vrot.slane %v238, %v315
    %v317 = vlaneseq
    %v318 = vshrl.u32 %v317, 7
    %v319 = vsub.s32 %v288, %v318
    %v320 = vrot.slane %v241, %v319
    %v321 = vsel %vm293, %v320, %v316
    %v322 = vlaneseq
    %v323 = vshrl.u32 %v322, 7
    %v324 = vsub.s32 %v283, %v323
    %v325 = vrot.slane %v244, %v324
    %v326 = vlaneseq
    %v327 = vshrl.u32 %v326, 7
    %v328 = vsub.s32 %v288, %v327
    %v329 = vrot.slane %v247, %v328
    %v330 = vsel %vm293, %v329, %v325
    %v331 = vlaneseq
    %v332 = vshrl.u32 %v331, 7
    %v333 = vsub.s32 %v283, %v332
    %v334 = vrot.slane %v250, %v333
    %v335 = vlaneseq
    %v336 = vshrl.u32 %v335, 7
    %v337 = vsub.s32 %v288, %v336
    %v338 = vrot.slane %v253, %v337
    %v339 = vsel %vm293, %v338, %v334
    %v340 = vlaneseq
    %v341 = vshrl.u32 %v340, 7
    %v342 = vsub.s32 %v283, %v341
    %v343 = vrot.slane %v256, %v342
    %v344 = vlaneseq
    %v345 = vshrl.u32 %v344, 7
    %v346 = vsub.s32 %v288, %v345
    %v347 = vrot.slane %v259, %v346
    %v348 = vsel %vm293, %v347, %v343
    %v349 = vlaneseq
    %v350 = vshrl.u32 %v349, 7
    %v351 = vsub.s32 %v283, %v350
    %v352 = vrot.slane %v262, %v351
    %v353 = vlaneseq
    %v354 = vshrl.u32 %v353, 7
    %v355 = vsub.s32 %v288, %v354
    %v356 = vrot.slane %v265, %v355
    %v357 = vsel %vm293, %v356, %v352
    %vm358 = vcmask 1041409
    %v359 = vsel %vm358, %v303, %v294
    %vm360 = vcmask 1042434
    %v361 = vsel %vm360, %v312, %v359
    %vm362 = vcmask 1043459
    %v363 = vsel %vm362, %v321, %v361
    %vm364 = vcmask 1044484
    %v365 = vsel %vm364, %v330, %v363
    %vm366 = vcmask 1045509
    %v367 = vsel %vm366, %v339, %v365
    %vm368 = vcmask 1046534
    %v369 = vsel %vm368, %v348, %v367
    %vm370 = vcmask 1047559
    %v371 = vsel %vm370, %v357, %v369
    %vm372 = vcmask 130048
    %v373 = vsel %vm372, %v371, 0
    %375 = vmatprep.subr.mxu0 %v107
    %376 = vmatpush1.msra.mxu0 %v106
    %377 = vmatprep.subr.mxu0 %v109
    %378 = vmatpush1.msra.mxu0 %v108
    %379 = vmatprep.subr.mxu0 0.0
    %380 = vmatpush1.msra.mxu0 0.0
    %381 = vmatprep.subr.mxu0 0.0
    %382 = vmatpush1.msra.mxu0 0.0
    %383 = vmatprep.subr.mxu0 0.0
    %384 = vmatpush1.msra.mxu0 0.0
    %385 = vmatprep.subr.mxu0 0.0
    %386 = vmatpush1.msra.mxu0 0.0
    %387 = vmatprep.subr.mxu0 0.0
    %388 = vmatpush1.msra.mxu0 0.0
    %389 = vmatprep.subr.mxu0 0.0
    %390 = vmatpush1.msra.mxu0 0.0
    %391 = vmatprep.subr.mxu0 0.0
    %392 = vmatpush1.msra.mxu0 0.0
    %393 = vmatprep.subr.mxu0 0.0
    %394 = vmatpush1.msra.mxu0 0.0
    %395 = vmatprep.subr.mxu0 0.0
    %396 = vmatpush1.msra.mxu0 0.0
    %397 = vmatprep.subr.mxu0 0.0
    %398 = vmatpush1.msra.mxu0 0.0
    %399 = vmatprep.subr.mxu0 0.0
    %400 = vmatpush1.msra.mxu0 0.0
    %401 = vmatprep.subr.mxu0 0.0
    %402 = vmatpush1.msra.mxu0 0.0
    %403 = vmatprep.subr.mxu0 0.0
    %404 = vmatpush1.msra.mxu0 0.0
    %405 = vmatprep.subr.mxu0 0.0
    %406 = vmatpush1.msra.mxu0 0.0
    %407 = vmatprep.subr.mxu0 0.0
    %408 = vmatpush1.msra.mxu0 0.0
    %409 = vmatprep.subr.mxu0 0.0
    %410 = vmatpush1.msra.mxu0 0.0
    %411 = vmatprep.subr.mxu0 0.0
    %412 = vmatpush1.msra.mxu0 0.0
    %413 = vmatprep.subr.mxu0 0.0
    %414 = vmatpush1.msra.mxu0 0.0
    %415 = vmatprep.subr.mxu0 0.0
    %416 = vmatpush1.msra.mxu0 0.0
    %417 = vmatprep.subr.mxu0 0.0
    %418 = vmatpush1.msra.mxu0 0.0
    %419 = vmatprep.subr.mxu0 0.0
    %420 = vmatpush1.msra.mxu0 0.0
    %421 = vmatprep.subr.mxu0 0.0
    %422 = vmatpush1.msra.mxu0 0.0
    %423 = vmatprep.subr.mxu0 0.0
    %424 = vmatpush1.msra.mxu0 0.0
    %425 = vmatprep.subr.mxu0 0.0
    %426 = vmatpush1.msra.mxu0 0.0
    %427 = vmatprep.subr.mxu0 0.0
    %428 = vmatpush1.msra.mxu0 0.0
    %429 = vmatprep.subr.mxu0 0.0
    %430 = vmatpush1.msra.mxu0 0.0
    %431 = vmatprep.subr.mxu0 0.0
    %432 = vmatpush1.msra.mxu0 0.0
    %433 = vmatprep.subr.mxu0 0.0
    %434 = vmatpush1.msra.mxu0 0.0
    %435 = vmatprep.subr.mxu0 0.0
    %436 = vmatpush1.msra.mxu0 0.0
    %437 = vmatprep.subr.mxu0 0.0
    %438 = vmatpush1.msra.mxu0 0.0
    %439 = vmatprep.mubr.f32.mxu0 0.0
    %440 = vmatmul.mubr.f32.gmra.mrb[0].mxu0 %v373
    %v441 = vpop.f32.mrb[0].mxu0
    %v442 = vadd.f32 %v110, %v441
    %v443 = vpop.f32.mrb[0].mxu0
    %v444 = vadd.f32 %v111, %v443
    %445 = vdwg.mxu0
    %v446 = vld [vmem:[#allocation5] sm:$0xff]
    %v447 = vld [vmem:[#allocation5 + $0x8] sm:$0xff]
    %v448 = vld [vmem:[#allocation5 + $0x10] sm:$0xff]
    %v449 = vld [vmem:[#allocation5 + $0x18] sm:$0xff]
    %v450 = vld [vmem:[#allocation5 + $0x20] sm:$0xff]
    %v451 = vld [vmem:[#allocation5 + $0x28] sm:$0xff]
    %v452 = vld [vmem:[#allocation5 + $0x30] sm:$0xff]
    %v453 = vld [vmem:[#allocation5 + $0x38] sm:$0xff]
    %v454 = vld [vmem:[#allocation5 + $0x40] sm:$0xff]
    %v455 = vld [vmem:[#allocation5 + $0x48] sm:$0xff]
    %v456 = vld [vmem:[#allocation5 + $0x50] sm:$0xff]
    %v457 = vld [vmem:[#allocation5 + $0x58] sm:$0xff]
    %v458 = vld [vmem:[#allocation5 + $0x60] sm:$0xff]
    %v459 = vld [vmem:[#allocation5 + $0x68] sm:$0xff]
    %v460 = vld [vmem:[#allocation5 + $0x70] sm:$0xff]
    %v461 = vld [vmem:[#allocation5 + $0x78] sm:$0xff]
    %462 = vmatprep.subr.mxu0 0.0
    %463 = vmatpush1.msra.mxu0 %v446
    %464 = vmatprep.subr.mxu0 0.0
    %465 = vmatpush1.msra.mxu0 %v447
    %466 = vmatprep.subr.mxu0 0.0
    %467 = vmatpush1.msra.mxu0 %v448
    %468 = vmatprep.subr.mxu0 0.0
    %469 = vmatpush1.msra.mxu0 %v449
    %470 = vmatprep.subr.mxu0 0.0
    %471 = vmatpush1.msra.mxu0 %v450
    %472 = vmatprep.subr.mxu0 0.0
    %473 = vmatpush1.msra.mxu0 %v451
    %474 = vmatprep.subr.mxu0 0.0
    %475 = vmatpush1.msra.mxu0 %v452
    %476 = vmatprep.subr.mxu0 0.0
    %477 = vmatpush1.msra.mxu0 %v453
    %478 = vmatprep.subr.mxu0 0.0
    %479 = vmatpush1.msra.mxu0 %v454
    %480 = vmatprep.subr.mxu0 0.0
    %481 = vmatpush1.msra.mxu0 %v455
    %482 = vmatprep.subr.mxu0 0.0
    %483 = vmatpush1.msra.mxu0 %v456
    %484 = vmatprep.subr.mxu0 0.0
    %485 = vmatpush1.msra.mxu0 %v457
    %486 = vmatprep.subr.mxu0 0.0
    %487 = vmatpush1.msra.mxu0 %v458
    %488 = vmatprep.subr.mxu0 0.0
    %489 = vmatpush1.msra.mxu0 %v459
    %490 = vmatprep.subr.mxu0 0.0
    %491 = vmatpush1.msra.mxu0 %v460
    %492 = vmatprep.subr.mxu0 0.0
    %493 = vmatpush1.msra.mxu0 %v461
    %494 = vmatprep.subr.mxu0 0.0
    %495 = vmatpush1.msra.mxu0 0.0
    %496 = vmatprep.subr.mxu0 0.0
    %497 = vmatpush1.msra.mxu0 0.0
    %498 = vmatprep.subr.mxu0 0.0
    %499 = vmatpush1.msra.mxu0 0.0
    %500 = vmatprep.subr.mxu0 0.0
    %501 = vmatpush1.msra.mxu0 0.0
    %502 = vmatprep.subr.mxu0 0.0
    %503 = vmatpush1.msra.mxu0 0.0
    %504 = vmatprep.subr.mxu0 0.0
    %505 = vmatpush1.msra.mxu0 0.0
    %506 = vmatprep.subr.mxu0 0.0
    %507 = vmatpush1.msra.mxu0 0.0
    %508 = vmatprep.subr.mxu0 0.0
    %509 = vmatpush1.msra.mxu0 0.0
    %510 = vmatprep.subr.mxu0 0.0
    %511 = vmatpush1.msra.mxu0 0.0
    %512 = vmatprep.subr.mxu0 0.0
    %513 = vmatpush1.msra.mxu0 0.0
    %514 = vmatprep.subr.mxu0 0.0
    %515 = vmatpush1.msra.mxu0 0.0
    %516 = vmatprep.subr.mxu0 0.0
    %517 = vmatpush1.msra.mxu0 0.0
    %518 = vmatprep.subr.mxu0 0.0
    %519 = vmatpush1.msra.mxu0 0.0
    %520 = vmatprep.subr.mxu0 0.0
    %521 = vmatpush1.msra.mxu0 0.0
    %522 = vmatprep.subr.mxu0 0.0
    %523 = vmatpush1.msra.mxu0 0.0
    %524 = vmatprep.subr.mxu0 0.0
    %525 = vmatpush1.msra.mxu0 0.0
    %526 = vmatprep.mubr.f32.mxu0 0.0
    %527 = vmatmul.mubr.f32.gmra.mrb[0].mxu0 %v185
    %v528 = vpop.f32.mrb[0].mxu0
    %v529 = vadd.f32 0.0, %v528
    %v530 = vpop.f32.mrb[0].mxu0
    %531 = vdwg.mxu0
    %532 = vmatprep.subr.mxu0 0.0
    %533 = vmatpush1.msra.mxu0 %v112
    %534 = vmatprep.subr.mxu0 0.0
    %535 = vmatpush1.msra.mxu0 %v113
    %536 = vmatprep.subr.mxu0 0.0
    %537 = vmatpush1.msra.mxu0 %v114
    %538 = vmatprep.subr.mxu0 0.0
    %539 = vmatpush1.msra.mxu0 %v115
    %540 = vmatprep.subr.mxu0 0.0
    %541 = vmatpush1.msra.mxu0 %v116
    %542 = vmatprep.subr.mxu0 0.0
    %543 = vmatpush1.msra.mxu0 %v117
    %544 = vmatprep.subr.mxu0 0.0
    %545 = vmatpush1.msra.mxu0 %v118
    %546 = vmatprep.subr.mxu0 0.0
    %547 = vmatpush1.msra.mxu0 %v119
    %548 = vmatprep.subr.mxu0 0.0
    %549 = vmatpush1.msra.mxu0 %v120
    %550 = vmatprep.subr.mxu0 0.0
    %551 = vmatpush1.msra.mxu0 %v121
    %552 = vmatprep.subr.mxu0 0.0
    %553 = vmatpush1.msra.mxu0 %v122
    %554 = vmatprep.subr.mxu0 0.0
    %555 = vmatpush1.msra.mxu0 %v123
    %556 = vmatprep.subr.mxu0 0.0
    %557 = vmatpush1.msra.mxu0 %v124
    %558 = vmatprep.subr.mxu0 0.0
    %559 = vmatpush1.msra.mxu0 %v125
    %560 = vmatprep.subr.mxu0 0.0
    %561 = vmatpush1.msra.mxu0 %v126
    %562 = vmatprep.subr.mxu0 0.0
    %563 = vmatpush1.msra.mxu0 %v127
    %564 = vmatprep.subr.mxu0 0.0
    %565 = vmatpush1.msra.mxu0 0.0
    %566 = vmatprep.subr.mxu0 0.0
    %567 = vmatpush1.msra.mxu0 0.0
    %568 = vmatprep.subr.mxu0 0.0
    %569 = vmatpush1.msra.mxu0 0.0
    %570 = vmatprep.subr.mxu0 0.0
    %571 = vmatpush1.msra.mxu0 0.0
    %572 = vmatprep.subr.mxu0 0.0
    %573 = vmatpush1.msra.mxu0 0.0
    %574 = vmatprep.subr.mxu0 0.0
    %575 = vmatpush1.msra.mxu0 0.0
    %576 = vmatprep.subr.mxu0 0.0
    %577 = vmatpush1.msra.mxu0 0.0
    %578 = vmatprep.subr.mxu0 0.0
    %579 = vmatpush1.msra.mxu0 0.0
    %580 = vmatprep.subr.mxu0 0.0
    %581 = vmatpush1.msra.mxu0 0.0
    %582 = vmatprep.subr.mxu0 0.0
    %583 = vmatpush1.msra.mxu0 0.0
    %584 = vmatprep.subr.mxu0 0.0
    %585 = vmatpush1.msra.mxu0 0.0
    %586 = vmatprep.subr.mxu0 0.0
    %587 = vmatpush1.msra.mxu0 0.0
    %588 = vmatprep.subr.mxu0 0.0
    %589 = vmatpush1.msra.mxu0 0.0
    %590 = vmatprep.subr.mxu0 0.0
    %591 = vmatpush1.msra.mxu0 0.0
    %592 = vmatprep.subr.mxu0 0.0
    %593 = vmatpush1.msra.mxu0 0.0
    %594 = vmatprep.subr.mxu0 0.0
    %595 = vmatpush1.msra.mxu0 0.0
    %596 = vmatprep.mubr.f32.mxu0 0.0
    %597 = vmatmul.mubr.f32.gmra.mrb[0].mxu0 %v529
    %v598 = vpop.f32.mrb[0].mxu0
    %v599 = vadd.f32 %v184, %v598
    %v600 = vpop.f32.mrb[0].mxu0
    %601 = vdwg.mxu0
    %v602 = vld [vmem:[#allocation8] sm:$0xff]
    %v603 = vld [vmem:[#allocation8 + $0x8] sm:$0xff]
    %v604 = vld [vmem:[#allocation8 + $0x10] sm:$0xff]
    %v605 = vld [vmem:[#allocation8 + $0x18] sm:$0xff]
    %v606 = vld [vmem:[#allocation8 + $0x20] sm:$0xff]
    %v607 = vld [vmem:[#allocation8 + $0x28] sm:$0xff]
    %v608 = vld [vmem:[#allocation8 + $0x30] sm:$0xff]
    %v609 = vld [vmem:[#allocation8 + $0x38] sm:$0xff]
    %v610 = vld [vmem:[#allocation8 + $0x40] sm:$0xff]
    %v611 = vld [vmem:[#allocation8 + $0x48] sm:$0xff]
    %v612 = vld [vmem:[#allocation8 + $0x50] sm:$0xff]
    %v613 = vld [vmem:[#allocation8 + $0x58] sm:$0xff]
    %v614 = vld [vmem:[#allocation8 + $0x60] sm:$0xff]
    %v615 = vld [vmem:[#allocation8 + $0x68] sm:$0xff]
    %v616 = vld [vmem:[#allocation8 + $0x70] sm:$0xff]
    %v617 = vld [vmem:[#allocation8 + $0x78] sm:$0xff]
    %v618 = vld [vmem:[#allocation8 + $0x80] sm:$0xff]
    %v619 = vld [vmem:[#allocation8 + $0x88] sm:$0xff]
    %v620 = vld [vmem:[#allocation8 + $0x90] sm:$0xff]
    %v621 = vld [vmem:[#allocation8 + $0x98] sm:$0xff]
    %v622 = vld [vmem:[#allocation8 + $0xa0] sm:$0xff]
    %v623 = vld [vmem:[#allocation8 + $0xa8] sm:$0xff]
    %v624 = vld [vmem:[#allocation8 + $0xb0] sm:$0xff]
    %v625 = vld [vmem:[#allocation8 + $0xb8] sm:$0xff]
    %v626 = vld [vmem:[#allocation8 + $0xc0] sm:$0xff]
    %v627 = vld [vmem:[#allocation8 + $0xc8] sm:$0xff]
    %v628 = vld [vmem:[#allocation8 + $0xd0] sm:$0xff]
    %v629 = vld [vmem:[#allocation8 + $0xd8] sm:$0xff]
    %v630 = vld [vmem:[#allocation8 + $0xe0] sm:$0xff]
    %v631 = vld [vmem:[#allocation8 + $0xe8] sm:$0xff]
    %v632 = vld [vmem:[#allocation8 + $0xf0] sm:$0xff]
    %v633 = vld [vmem:[#allocation8 + $0xf8] sm:$0xff]
    %634 = vmatprep.subr.mxu0 0.0
    %635 = vmatpush1.msra.mxu0 %v602
    %636 = vmatprep.subr.mxu0 0.0
    %637 = vmatpush1.msra.mxu0 %v603
    %638 = vmatprep.subr.mxu0 0.0
    %639 = vmatpush1.msra.mxu0 %v604
    %640 = vmatprep.subr.mxu0 0.0
    %641 = vmatpush1.msra.mxu0 %v605
    %642 = vmatprep.subr.mxu0 0.0
    %643 = vmatpush1.msra.mxu0 %v606
    %644 = vmatprep.subr.mxu0 0.0
    %645 = vmatpush1.msra.mxu0 %v607
    %646 = vmatprep.subr.mxu0 0.0
    %647 = vmatpush1.msra.mxu0 %v608
    %648 = vmatprep.subr.mxu0 0.0
    %649 = vmatpush1.msra.mxu0 %v609
    %650 = vmatprep.subr.mxu0 0.0
    %651 = vmatpush1.msra.mxu0 %v610
    %652 = vmatprep.subr.mxu0 0.0
    %653 = vmatpush1.msra.mxu0 %v611
    %654 = vmatprep.subr.mxu0 0.0
    %655 = vmatpush1.msra.mxu0 %v612
    %656 = vmatprep.subr.mxu0 0.0
    %657 = vmatpush1.msra.mxu0 %v613
    %658 = vmatprep.subr.mxu0 0.0
    %659 = vmatpush1.msra.mxu0 %v614
    %660 = vmatprep.subr.mxu0 0.0
    %661 = vmatpush1.msra.mxu0 %v615
    %662 = vmatprep.subr.mxu0 0.0
    %663 = vmatpush1.msra.mxu0 %v616
    %664 = vmatprep.subr.mxu0 0.0
    %665 = vmatpush1.msra.mxu0 %v617
    %666 = vmatprep.subr.mxu0 0.0
    %667 = vmatpush1.msra.mxu0 %v618
    %668 = vmatprep.subr.mxu0 0.0
    %669 = vmatpush1.msra.mxu0 %v619
    %670 = vmatprep.subr.mxu0 0.0
    %671 = vmatpush1.msra.mxu0 %v620
    %672 = vmatprep.subr.mxu0 0.0
    %673 = vmatpush1.msra.mxu0 %v621
    %674 = vmatprep.subr.mxu0 0.0
    %675 = vmatpush1.msra.mxu0 %v622
    %676 = vmatprep.subr.mxu0 0.0
    %677 = vmatpush1.msra.mxu0 %v623
    %678 = vmatprep.subr.mxu0 0.0
    %679 = vmatpush1.msra.mxu0 %v624
    %680 = vmatprep.subr.mxu0 0.0
    %681 = vmatpush1.msra.mxu0 %v625
    %682 = vmatprep.subr.mxu0 0.0
    %683 = vmatpush1.msra.mxu0 %v626
    %684 = vmatprep.subr.mxu0 0.0
    %685 = vmatpush1.msra.mxu0 %v627
    %686 = vmatprep.subr.mxu0 0.0
    %687 = vmatpush1.msra.mxu0 %v628
    %688 = vmatprep.subr.mxu0 0.0
    %689 = vmatpush1.msra.mxu0 %v629
    %690 = vmatprep.subr.mxu0 0.0
    %691 = vmatpush1.msra.mxu0 %v630
    %692 = vmatprep.subr.mxu0 0.0
    %693 = vmatpush1.msra.mxu0 %v631
    %694 = vmatprep.subr.mxu0 0.0
    %695 = vmatpush1.msra.mxu0 %v632
    %696 = vmatprep.subr.mxu0 0.0
    %697 = vmatpush1.msra.mxu0 %v633
    %698 = vmatprep.mubr.f32.mxu0 %v444
    %699 = vmatmul.mubr.f32.gmra.mrb[0].mxu0 %v442
    %v700 = vpop.f32.mrb[0].mxu0
    %v701 = vadd.f32 0.0, %v700
    %v702 = vpop.f32.mrb[0].mxu0
    %703 = vdwg.mxu0
    %704 = vmatprep.subr.mxu0 0.0
    %705 = vmatpush1.msra.mxu0 %v128
    %706 = vmatprep.subr.mxu0 0.0
    %707 = vmatpush1.msra.mxu0 %v129
    %708 = vmatprep.subr.mxu0 0.0
    %709 = vmatpush1.msra.mxu0 %v130
    %710 = vmatprep.subr.mxu0 0.0
    %711 = vmatpush1.msra.mxu0 %v131
    %712 = vmatprep.subr.mxu0 0.0
    %713 = vmatpush1.msra.mxu0 %v132
    %714 = vmatprep.subr.mxu0 0.0
    %715 = vmatpush1.msra.mxu0 %v133
    %716 = vmatprep.subr.mxu0 0.0
    %717 = vmatpush1.msra.mxu0 %v134
    %718 = vmatprep.subr.mxu0 0.0
    %719 = vmatpush1.msra.mxu0 %v135
    %720 = vmatprep.subr.mxu0 0.0
    %721 = vmatpush1.msra.mxu0 %v136
    %722 = vmatprep.subr.mxu0 0.0
    %723 = vmatpush1.msra.mxu0 %v137
    %724 = vmatprep.subr.mxu0 0.0
    %725 = vmatpush1.msra.mxu0 %v138
    %726 = vmatprep.subr.mxu0 0.0
    %727 = vmatpush1.msra.mxu0 %v139
    %728 = vmatprep.subr.mxu0 0.0
    %729 = vmatpush1.msra.mxu0 %v140
    %730 = vmatprep.subr.mxu0 0.0
    %731 = vmatpush1.msra.mxu0 %v141
    %732 = vmatprep.subr.mxu0 0.0
    %733 = vmatpush1.msra.mxu0 %v142
    %734 = vmatprep.subr.mxu0 0.0
    %735 = vmatpush1.msra.mxu0 %v143
    %736 = vmatprep.subr.mxu0 0.0
    %737 = vmatpush1.msra.mxu0 0.0
    %738 = vmatprep.subr.mxu0 0.0
    %739 = vmatpush1.msra.mxu0 0.0
    %740 = vmatprep.subr.mxu0 0.0
    %741 = vmatpush1.msra.mxu0 0.0
    %742 = vmatprep.subr.mxu0 0.0
    %743 = vmatpush1.msra.mxu0 0.0
    %744 = vmatprep.subr.mxu0 0.0
    %745 = vmatpush1.msra.mxu0 0.0
    %746 = vmatprep.subr.mxu0 0.0
    %747 = vmatpush1.msra.mxu0 0.0
    %748 = vmatprep.subr.mxu0 0.0
    %749 = vmatpush1.msra.mxu0 0.0
    %750 = vmatprep.subr.mxu0 0.0
    %751 = vmatpush1.msra.mxu0 0.0
    %752 = vmatprep.subr.mxu0 0.0
    %753 = vmatpush1.msra.mxu0 0.0
    %754 = vmatprep.subr.mxu0 0.0
    %755 = vmatpush1.msra.mxu0 0.0
    %756 = vmatprep.subr.mxu0 0.0
    %757 = vmatpush1.msra.mxu0 0.0
    %758 = vmatprep.subr.mxu0 0.0
    %759 = vmatpush1.msra.mxu0 0.0
    %760 = vmatprep.subr.mxu0 0.0
    %761 = vmatpush1.msra.mxu0 0.0
    %762 = vmatprep.subr.mxu0 0.0
    %763 = vmatpush1.msra.mxu0 0.0
    %764 = vmatprep.subr.mxu0 0.0
    %765 = vmatpush1.msra.mxu0 0.0
    %766 = vmatprep.subr.mxu0 0.0
    %767 = vmatpush1.msra.mxu0 0.0
    %768 = vmatprep.mubr.f32.mxu0 0.0
    %769 = vmatmul.mubr.f32.gmra.mrb[0].mxu0 %v599
    %v770 = vpop.f32.mrb[0].mxu0
    %v771 = vadd.f32 0.0, %v770
    %v772 = vpop.f32.mrb[0].mxu0
    %773 = vdwg.mxu0
    %v774 = vadd.f32 %v701, %v176
    %v775 = vadd.f32 %v771, %v177
    %v776 = vmul.f32 %v774, 0.5
    %v777 = vmul.f32 %v775, 0.5
    %v778 = vmul.f32 %v774, 0.70710677
    %v779 = vmul.f32 %v775, 0.70710677
    %v780 = verf.f32.pop %v778
    %v781 = verf.f32.pop %v779
    %v782 = vadd.f32 %v780, 1.0
    %v783 = vadd.f32 %v781, 1.0
    %v784 = vmul.f32 %v776, %v782
    %v785 = vmul.f32 %v777, %v783
    %786 = vmatprep.subr.mxu0 %v145
    %787 = vmatpush1.msra.mxu0 %v144
    %788 = vmatprep.subr.mxu0 %v147
    %789 = vmatpush1.msra.mxu0 %v146
    %790 = vmatprep.subr.mxu0 %v149
    %791 = vmatpush1.msra.mxu0 %v148
    %792 = vmatprep.subr.mxu0 %v151
    %793 = vmatpush1.msra.mxu0 %v150
    %794 = vmatprep.subr.mxu0 %v153
    %795 = vmatpush1.msra.mxu0 %v152
    %796 = vmatprep.subr.mxu0 %v155
    %797 = vmatpush1.msra.mxu0 %v154
    %798 = vmatprep.subr.mxu0 %v157
    %799 = vmatpush1.msra.mxu0 %v156
    %800 = vmatprep.subr.mxu0 %v159
    %801 = vmatpush1.msra.mxu0 %v158
    %802 = vmatprep.subr.mxu0 %v161
    %803 = vmatpush1.msra.mxu0 %v160
    %804 = vmatprep.subr.mxu0 %v163
    %805 = vmatpush1.msra.mxu0 %v162
    %806 = vmatprep.subr.mxu0 %v165
    %807 = vmatpush1.msra.mxu0 %v164
    %808 = vmatprep.subr.mxu0 %v167
    %809 = vmatpush1.msra.mxu0 %v166
    %810 = vmatprep.subr.mxu0 %v169
    %811 = vmatpush1.msra.mxu0 %v168
    %812 = vmatprep.subr.mxu0 %v171
    %813 = vmatpush1.msra.mxu0 %v170
    %814 = vmatprep.subr.mxu0 %v173
    %815 = vmatpush1.msra.mxu0 %v172
    %816 = vmatprep.subr.mxu0 %v175
    %817 = vmatpush1.msra.mxu0 %v174
    %818 = vmatprep.subr.mxu0 0.0
    %819 = vmatpush1.msra.mxu0 0.0
    %820 = vmatprep.subr.mxu0 0.0
    %821 = vmatpush1.msra.mxu0 0.0
    %822 = vmatprep.subr.mxu0 0.0
    %823 = vmatpush1.msra.mxu0 0.0
    %824 = vmatprep.subr.mxu0 0.0
    %825 = vmatpush1.msra.mxu0 0.0
    %826 = vmatprep.subr.mxu0 0.0
    %827 = vmatpush1.msra.mxu0 0.0
    %828 = vmatprep.subr.mxu0 0.0
    %829 = vmatpush1.msra.mxu0 0.0
    %830 = vmatprep.subr.mxu0 0.0
    %831 = vmatpush1.msra.mxu0 0.0
    %832 = vmatprep.subr.mxu0 0.0
    %833 = vmatpush1.msra.mxu0 0.0
    %834 = vmatprep.subr.mxu0 0.0
    %835 = vmatpush1.msra.mxu0 0.0
    %836 = vmatprep.subr.mxu0 0.0
    %837 = vmatpush1.msra.mxu0 0.0
    %838 = vmatprep.subr.mxu0 0.0
    %839 = vmatpush1.msra.mxu0 0.0
    %840 = vmatprep.subr.mxu0 0.0
    %841 = vmatpush1.msra.mxu0 0.0
    %842 = vmatprep.subr.mxu0 0.0
    %843 = vmatpush1.msra.mxu0 0.0
    %844 = vmatprep.subr.mxu0 0.0
    %845 = vmatpush1.msra.mxu0 0.0
    %846 = vmatprep.subr.mxu0 0.0
    %847 = vmatpush1.msra.mxu0 0.0
    %848 = vmatprep.subr.mxu0 0.0
    %849 = vmatpush1.msra.mxu0 0.0
    %850 = vmatprep.mubr.f32.mxu0 0.0
    %851 = vmatmul.mubr.f32.gmra.mrb[0].mxu0 %v784
    %v852 = vpop.f32.mrb[0].mxu0
    %v853 = vadd.f32 0.0, %v852
    %v854 = vpop.f32.mrb[0].mxu0
    %v855 = vadd.f32 0.0, %v854
    %856 = vmatprep.mubr.f32.mxu0 0.0
    %857 = vmatmul.mubr.f32.gmra.mrb[0].mxu0 %v785
    %v858 = vpop.f32.mrb[0].mxu0
    %v859 = vadd.f32 0.0, %v858
    %v860 = vpop.f32.mrb[0].mxu0
    %v861 = vadd.f32 0.0, %v860
    %862 = vdwg.mxu0
    %v863 = vlaneseq
    %v864 = vshrl.u32 %v863, 7
    %v865 = vadd.s32 %v864, 8
    %vm866 = vcmp.lt.s32.totalorder %v864, 8
    %vm867 = vcmp.lt.s32.totalorder %v865, 8
    %v868 = vsel %vm866, %v853, %v855
    %v869 = vsel %vm867, %v859, %v861
    %v870 = vadd.f32 %v868, %v178
    %v871 = vadd.f32 %v869, %v179
    %v872 = vadd.f32 %v870, %v774
    %v873 = vadd.f32 %v871, %v775
    %874 = vadd.xlane.f32.xlu0 %v872
    %v875 = vpop.xlane.xlu0 %874
    %876 = vadd.xlane.f32.xlu0 %v873
    %v877 = vpop.xlane.xlu0 %876
    %v878 = vrcp.pop 128.0
    %v879 = vmul.f32 %v875, %v878
    %v880 = vmul.f32 %v877, %v878
    %v881 = vsub.f32 %v872, %v879
    %v882 = vsub.f32 %v873, %v880
    %v883 = vmul.f32 %v881, %v881
    %v884 = vmul.f32 %v882, %v882
    %885 = vadd.xlane.f32.xlu0 %v883
    %v886 = vpop.xlane.xlu0 %885
    %887 = vadd.xlane.f32.xlu0 %v884
    %v888 = vpop.xlane.xlu0 %887
    %v889 = vmul.f32 %v886, %v878
    %v890 = vmul.f32 %v888, %v878
    %v891 = vadd.f32 %v889, 1e-05
    %v892 = vadd.f32 %v890, 1e-05
    %v893 = vrsqrt.pop %v891
    %v894 = vrsqrt.pop %v892
    %v895 = vmul.f32 %v881, %v893
    %v896 = vmul.f32 %v882, %v894
    %v897 = vmul.f32 %v895, %v180
    %v898 = vmul.f32 %v896, %v181
    %v899 = vadd.f32 %v897, %v182
    %v900 = vadd.f32 %v898, %v183
    %901 = vmatprep.subr.mxu0 0.0
    %902 = vmatpush1.xpose.msra.mxu0 %v899
    %903 = vmatprep.subr.mxu0 0.0
    %904 = vmatpush1.xpose.msra.mxu0 %v900
    %905 = vmatprep.subr.mxu0 0.0
    %906 = vmatpush1.xpose.msra.mxu0 0.0
    %907 = vmatprep.subr.mxu0 0.0
    %908 = vmatpush1.xpose.msra.mxu0 0.0
    %909 = vmatprep.subr.mxu0 0.0
    %910 = vmatpush1.xpose.msra.mxu0 0.0
    %911 = vmatprep.subr.mxu0 0.0
    %912 = vmatpush1.xpose.msra.mxu0 0.0
    %913 = vmatprep.subr.mxu0 0.0
    %914 = vmatpush1.xpose.msra.mxu0 0.0
    %915 = vmatprep.subr.mxu0 0.0
    %916 = vmatpush1.xpose.msra.mxu0 0.0
    %917 = vmatprep.subr.mxu0 0.0
    %918 = vmatpush1.xpose.msra.mxu0 0.0
    %919 = vmatprep.subr.mxu0 0.0
    %920 = vmatpush1.xpose.msra.mxu0 0.0
    %921 = vmatprep.subr.mxu0 0.0
    %922 = vmatpush1.xpose.msra.mxu0 0.0
    %923 = vmatprep.subr.mxu0 0.0
    %924 = vmatpush1.xpose.msra.mxu0 0.0
    %925 = vmatprep.subr.mxu0 0.0
    %926 = vmatpush1.xpose.msra.mxu0 0.0
    %927 = vmatprep.subr.mxu0 0.0
    %928 = vmatpush1.xpose.msra.mxu0 0.0
    %929 = vmatprep.subr.mxu0 0.0
    %930 = vmatpush1.xpose.msra.mxu0 0.0
    %931 = vmatprep.subr.mxu0 0.0
    %932 = vmatpush1.xpose.msra.mxu0 0.0
    %933 = vmatprep.subr.mxu0 0.0
    %934 = vmatpush1.xpose.msra.mxu0 0.0
    %935 = vmatprep.subr.mxu0 0.0
    %936 = vmatpush1.xpose.msra.mxu0 0.0
    %937 = vmatprep.subr.mxu0 0.0
    %938 = vmatpush1.xpose.msra.mxu0 0.0
    %939 = vmatprep.subr.mxu0 0.0
    %940 = vmatpush1.xpose.msra.mxu0 0.0
    %941 = vmatprep.subr.mxu0 0.0
    %942 = vmatpush1.xpose.msra.mxu0 0.0
    %943 = vmatprep.subr.mxu0 0.0
    %944 = vmatpush1.xpose.msra.mxu0 0.0
    %945 = vmatprep.subr.mxu0 0.0
    %946 = vmatpush1.xpose.msra.mxu0 0.0
    %947 = vmatprep.subr.mxu0 0.0
    %948 = vmatpush1.xpose.msra.mxu0 0.0
    %949 = vmatprep.subr.mxu0 0.0
    %950 = vmatpush1.xpose.msra.mxu0 0.0
    %951 = vmatprep.subr.mxu0 0.0
    %952 = vmatpush1.xpose.msra.mxu0 0.0
    %953 = vmatprep.subr.mxu0 0.0
    %954 = vmatpush1.xpose.msra.mxu0 0.0
    %955 = vmatprep.subr.mxu0 0.0
    %956 = vmatpush1.xpose.msra.mxu0 0.0
    %957 = vmatprep.subr.mxu0 0.0
    %958 = vmatpush1.xpose.msra.mxu0 0.0
    %959 = vmatprep.subr.mxu0 0.0
    %960 = vmatpush1.xpose.msra.mxu0 0.0
    %961 = vmatprep.subr.mxu0 0.0
    %962 = vmatpush1.xpose.msra.mxu0 0.0
    %963 = vmatprep.subr.mxu0 0.0
    %964 = vmatpush1.xpose.msra.mxu0 0.0
    %965 = vmatprep.mubr.f32.mxu0 0.0
    %966 = vmatmul.mubr.f32.gmra.mrb[0].mxu0 %v899
    %v967 = vpop.f32.mrb[0].mxu0
    %v968 = vadd.f32 0.0, %v967
    %v969 = vpop.f32.mrb[0].mxu0
    %970 = vmatprep.mubr.f32.mxu0 0.0
    %971 = vmatmul.mubr.f32.gmra.mrb[0].mxu0 %v900
    %v972 = vpop.f32.mrb[0].mxu0
    %v973 = vadd.f32 0.0, %v972
    %v974 = vpop.f32.mrb[0].mxu0
    %975 = vdwg.mxu0
    %977 = vrot.lane.b32.xlu0 %v973, 120
    %v978 = vpop.permute.xlu0 %977
    %v980 = vadd.f32 %v968, %v978
    %v981 = vmul.f32 %v980, 0.5
    %vm982 = vcmask 64512
    %v983 = vsel %vm982, %v981, -inf
    %984 = vmax.xlane.f32.xlu0 %v983
    %v985 = vpop.xlane.xlu0 %984
    %v986 = vsub.f32 %v981, %v985
    %v987 = vmul.f32 %v986, 1.442695
    %v988 = vpow.pop %v987
    %v989 = vsel %vm982, %v988, 0.0
    %990 = vadd.xlane.f32.xlu0 %v989
    %v991 = vpop.xlane.xlu0 %990
    %v992 = vrcp.pop %v991
    %v993 = vmul.f32 %v988, %v992
    %v994 = vsel %vm982, %v973, -inf
    %995 = vmax.xlane.f32.xlu0 %v994
    %v996 = vpop.xlane.xlu0 %995
    %v997 = vsub.f32 %v973, %v996
    %v998 = vmul.f32 %v997, 1.442695
    %v999 = vpow.pop %v998
    %v1000 = vsel %vm982, %v999, 0.0
    %1001 = vadd.xlane.f32.xlu0 %v1000
    %v1002 = vpop.xlane.xlu0 %1001
    %v1003 = vlog2.pop %v1002
    %v1004 = vmul.f32 %v1003, 0.6931472
    %v1005 = vsub.f32 %v997, %v1004
    %1006 = vxpose.xlu0.b32.start [1/16] %v973, 128
    %1007 = vxpose.xlu0.b32.cont [2/16] 0.0, 128
    %1008 = vxpose.xlu0.b32.cont [3/16] 0.0, 128
    %1009 = vxpose.xlu0.b32.cont [4/16] 0.0, 128
    %1010 = vxpose.xlu0.b32.cont [5/16] 0.0, 128
    %1011 = vxpose.xlu0.b32.cont [6/16] 0.0, 128
    %1012 = vxpose.xlu0.b32.cont [7/16] 0.0, 128
    %1013 = vxpose.xlu0.b32.cont [8/16] 0.0, 128
    %1014 = vxpose.xlu0.b32.cont [9/16] 0.0, 128
    %1015 = vxpose.xlu0.b32.cont [10/16] 0.0, 128
    %1016 = vxpose.xlu0.b32.cont [11/16] 0.0, 128
    %1017 = vxpose.xlu0.b32.cont [12/16] 0.0, 128
    %1018 = vxpose.xlu0.b32.cont [13/16] 0.0, 128
    %1019 = vxpose.xlu0.b32.cont [14/16] 0.0, 128
    %1020 = vxpose.xlu0.b32.cont [15/16] 0.0, 128
    %1021 = vxpose.xlu0.b32.end [16/16] 0.0, 128
    %v1022 = vpop.trf.xlu0
    %v1023 = vpop.trf.xlu0
    %v1024 = vpop.trf.xlu0
    %v1025 = vpop.trf.xlu0
    %v1026 = vpop.trf.xlu0
    %v1027 = vpop.trf.xlu0
    %v1028 = vpop.trf.xlu0
    %v1029 = vpop.trf.xlu0
    %v1030 = vpop.trf.xlu0
    %v1031 = vpop.trf.xlu0
    %v1032 = vpop.trf.xlu0
    %v1033 = vpop.trf.xlu0
    %v1034 = vpop.trf.xlu0
    %v1035 = vpop.trf.xlu0
    %v1036 = vpop.trf.xlu0
    %v1037 = vpop.trf.xlu0
    %v1038 = vsel %vm982, %v1022, -inf
    %1039 = vmax.xlane.f32.xlu0 %v1038
    %v1040 = vpop.xlane.xlu0 %1039
    %v1041 = vsub.f32 %v1022, %v1040
    %v1042 = vmul.f32 %v1041, 1.442695
    %v1043 = vpow.pop %v1042
    %v1044 = vsel %vm982, %v1043, 0.0
    %1045 = vadd.xlane.f32.xlu0 %v1044
    %v1046 = vpop.xlane.xlu0 %1045
    %v1047 = vlog2.pop %v1046
    %v1048 = vmul.f32 %v1047, 0.6931472
    %v1049 = vsub.f32 %v1041, %v1048
    %v1050 = vmul.f32 %v993, %v1005
    %v1051 = vsel %vm982, %v1050, 0.0
    %1052 = vadd.xlane.f32.xlu0 %v1051
    %v1053 = vpop.xlane.xlu0 %1052
    %v1054 = vrot.slane %v1053, 4
    %v1055 = vadd.f32 %v1053, %v1054
    %v1056 = vrot.slane %v1055, 2
    %v1057 = vadd.f32 %v1055, %v1056
    %v1058 = vrot.slane %v1057, 1
    %v1059 = vadd.f32 %v1057, %v1058
    %s1060 = vtos %v1059
    %s1061 = ssub.f32 0.0, %s1060
    %1062 = vxpose.xlu0.b32.start [1/16] %v993, 128
    %1063 = vxpose.xlu0.b32.cont [2/16] 0.0, 128
    %1064 = vxpose.xlu0.b32.cont [3/16] 0.0, 128
    %1065 = vxpose.xlu0.b32.cont [4/16] 0.0, 128
    %1066 = vxpose.xlu0.b32.cont [5/16] 0.0, 128
    %1067 = vxpose.xlu0.b32.cont [6/16] 0.0, 128
    %1068 = vxpose.xlu0.b32.cont [7/16] 0.0, 128
    %1069 = vxpose.xlu0.b32.cont [8/16] 0.0, 128
    %1070 = vxpose.xlu0.b32.cont [9/16] 0.0, 128
    %1071 = vxpose.xlu0.b32.cont [10/16] 0.0, 128
    %1072 = vxpose.xlu0.b32.cont [11/16] 0.0, 128
    %1073 = vxpose.xlu0.b32.cont [12/16] 0.0, 128
    %1074 = vxpose.xlu0.b32.cont [13/16] 0.0, 128
    %1075 = vxpose.xlu0.b32.cont [14/16] 0.0, 128
    %1076 = vxpose.xlu0.b32.cont [15/16] 0.0, 128
    %1077 = vxpose.xlu0.b32.end [16/16] 0.0, 128
    %v1078 = vpop.trf.xlu0
    %v1079 = vpop.trf.xlu0
    %v1080 = vpop.trf.xlu0
    %v1081 = vpop.trf.xlu0
    %v1082 = vpop.trf.xlu0
    %v1083 = vpop.trf.xlu0
    %v1084 = vpop.trf.xlu0
    %v1085 = vpop.trf.xlu0
    %v1086 = vpop.trf.xlu0
    %v1087 = vpop.trf.xlu0
    %v1088 = vpop.trf.xlu0
    %v1089 = vpop.trf.xlu0
    %v1090 = vpop.trf.xlu0
    %v1091 = vpop.trf.xlu0
    %v1092 = vpop.trf.xlu0
    %v1093 = vpop.trf.xlu0
    %v1094 = vmul.f32 %v1078, %v1049
    %v1095 = vsel %vm982, %v1094, 0.0
    %1096 = vadd.xlane.f32.xlu0 %v1095
    %v1097 = vpop.xlane.xlu0 %1096
    %v1098 = vrot.slane %v1097, 4
    %v1099 = vadd.f32 %v1097, %v1098
    %v1100 = vrot.slane %v1099, 2
    %v1101 = vadd.f32 %v1099, %v1100
    %v1102 = vrot.slane %v1101, 1
    %v1103 = vadd.f32 %v1101, %v1102
    %s1104 = vtos %v1103
    %s1105 = ssub.f32 0.0, %s1104
    %s1106 = sadd.f32 %s1061, %s1105
    %v1107 = vrcp.pop 16.0
    %s1108 = vtos %v1107
    %s1109 = smul.f32 %s1106, %s1108
    %s1110 = scalar_lea.smem [#allocation13], 0
    %1111 = sst [smem:[%s1110]] %s1109
    // Predicated region
    $region50: #{tpu_custom_call.1} parent=1 // pred_check
      _
    $region51: #{tpu_custom_call.1} parent=1 // pred_check_branch
      %1113 = sbr.rel (0) target = $region53
    $region52: #{tpu_custom_call.1} parent=1 // pred_region
      %s1115 = ssub.s32 16, 16
      %1116 = vsyncadd [#allocation4], %s1115
      %1119 = dma.smem_to_hbm [#allocation13], 16, %s6, [#allocation4]
    $region53: #{tpu_custom_call.1} parent=1 // pred_fallthru
      _
    // Predicated region
    $region54: #{tpu_custom_call.1} parent=1 // pred_check
      _
    $region55: #{tpu_custom_call.1} parent=1 // pred_check_branch
      %1121 = sbr.rel (0) target = $region57
    $region56: #{tpu_custom_call.1} parent=1 // pred_region
      %1122 = dma.done [#allocation4], 16
    $region57: #{tpu_custom_call.1} parent=1 // pred_fallthru
      _
    %1123 = sfence
    %1124 = vsyncpa [#allocation3], 1
    %1125 = vsyncpa [#allocation6], 1
    %1126 = vsyncpa [#allocation9], 1
    %1127 = vsyncpa [#allocation12], 1
    %1128 = vsyncpa [#allocation4], 1

</llo_original>
